<compile_context>
chip_gen: v6e
topology: v6e:2x2x1
jax: 0.10.0
libtpu: 0.0.40
codegen_flags: <defaults>
</compile_context>

<pallas_src>
import math

import jax
import jax.numpy as jnp
from jax.experimental import pallas as pl
from jax.experimental.pallas import tpu as pltpu

NUM_GROUPS = 32
EPS = 1e-6


# --------------------------------------------------------------------------- #
# Kernels
# --------------------------------------------------------------------------- #
def groupnorm_stats_kernel(x_ref, gamma_ref, beta_ref, gmat_ref, gmat_t_ref,
                           scale_ref, shift_ref):
    """Per-batch GroupNorm stats -> per-channel scale/shift.

    Uses a centered (two-pass) variance to avoid E[x^2]-E[x]^2 cancellation.
    Group reduction is a tiny one-hot matmul (kept at HIGHEST precision)."""
    x = x_ref[0]                                           # (HW, C) f32
    hw, c = x.shape
    g = gmat_ref.shape[1]
    n = float(hw * (c // g))
    hi = jax.lax.Precision.HIGHEST                         # tiny (1,C)x(C,G) dots

    s1 = jnp.sum(x, axis=0, keepdims=True)                                  # (1, C)
    mean_g = jnp.dot(s1, gmat_ref[...], precision=hi,
                     preferred_element_type=jnp.float32) / n                # (1, G)
    mean_c = jnp.dot(mean_g, gmat_t_ref[...], precision=hi,
                     preferred_element_type=jnp.float32)                    # (1, C)
    d = x - mean_c                                                          # centered
    s2 = jnp.sum(d * d, axis=0, keepdims=True)                              # (1, C)
    var_g = jnp.dot(s2, gmat_ref[...], precision=hi,
                    preferred_element_type=jnp.float32) / n                 # (1, G)
    inv_c = jnp.dot(jax.lax.rsqrt(var_g + EPS), gmat_t_ref[...], precision=hi,
                    preferred_element_type=jnp.float32)                     # (1, C)
    scale = inv_c * gamma_ref[...]
    shift = beta_ref[...] - mean_c * scale
    scale_ref[0] = scale
    shift_ref[0] = shift


def qkv_project_kernel(x_ref, scale_ref, shift_ref, wqkv_ref, bqkv_ref,
                       q_ref, k_ref, v_ref):
    """Normalize one HW tile and run the fused q|k|v projection (bf16 MXU)."""
    c = q_ref.shape[2]
    h = x_ref[0] * scale_ref[0] + shift_ref[0]                              # (TQ, C) f32
    qkv = jnp.dot(h.astype(jnp.bfloat16), wqkv_ref[...],
                  preferred_element_type=jnp.float32) + bqkv_ref[...]       # (TQ, 3C) f32
    q_ref[0] = qkv[:, :c].astype(jnp.bfloat16)        # scale already folded into wq/bq
    k_ref[0] = qkv[:, c:2 * c].astype(jnp.bfloat16)
    v_ref[0] = qkv[:, 2 * c:].astype(jnp.bfloat16)


def flash_attn_kernel(x_ref, q_ref, k_ref, v_ref, wp_ref, bp_ref, o_ref,
                      m_sc, l_sc, acc_sc):
    """Online-softmax attention over KV tiles + proj_out + residual."""
    ki = pl.program_id(2)

    @pl.when(ki == 0)
    def _():
        m_sc[...] = jnp.full_like(m_sc, -jnp.inf)
        l_sc[...] = jnp.zeros_like(l_sc)
        acc_sc[...] = jnp.zeros_like(acc_sc)

    q = q_ref[0]                                   # (TQ, C)  bf16 (scale pre-folded)
    k = k_ref[0]                                   # (TKV, C) bf16
    v = v_ref[0]                                   # (TKV, C) bf16

    # q @ k^T without materializing a transpose: contract the last dims.
    s = jax.lax.dot_general(q, k, (((1,), (1,)), ((), ())),
                            preferred_element_type=jnp.float32)             # (TQ, TKV) f32

    m_prev = m_sc[...]
    m_new = jnp.maximum(m_prev, jnp.max(s, axis=-1, keepdims=True))         # (TQ, 1)
    alpha = jnp.exp(m_prev - m_new)
    p = jnp.exp(s - m_new)                                                  # (TQ, TKV) f32
    l_sc[...] = alpha * l_sc[...] + jnp.sum(p, axis=-1, keepdims=True)
    acc_sc[...] = alpha * acc_sc[...] + jnp.dot(
        p.astype(jnp.bfloat16), v, preferred_element_type=jnp.float32)      # (TQ, C)
    m_sc[...] = m_new

    @pl.when(ki == pl.num_programs(2) - 1)
    def _():
        # Normalize AFTER the PV matmul (HW*C elements, EUP reciprocal).
        out = acc_sc[...] * pl.reciprocal(l_sc[...], approx=True)           # (TQ, C) f32
        proj = jnp.dot(out.astype(jnp.bfloat16), wp_ref[...],
                       preferred_element_type=jnp.float32) + bp_ref[...]
        o_ref[0] = x_ref[0] + proj                                          # residual


# --------------------------------------------------------------------------- #
# Wrapper
# --------------------------------------------------------------------------- #
def _pick_tile(hw):
    # Largest MXU-friendly tile that still yields >=2 tiles (keeps both v7x
    # TensorCores busy via the 'parallel' Q axis even at B=1); else full extent.
    for t in (512, 256, 128):
        if hw % t == 0 and hw // t >= 2:
            return t
    return hw


def attn_block(x_nchw, params, *, tq=None, tkv=None):
    """x_nchw: (B, C, H, W) float32.  Returns (B, C, H, W) float32."""
    B, C, H, W = x_nchw.shape
    G = NUM_GROUPS
    assert C % G == 0
    HW = H * W
    TQ = tq or _pick_tile(HW)
    TKV = tkv or _pick_tile(HW)
    assert HW % TQ == 0 and HW % TKV == 0
    nq, nkv = HW // TQ, HW // TKV

    f32, bf16 = jnp.float32, jnp.bfloat16

    # glue: NCHW -> (B, HW, C); channels on the lane axis.
    x_seq = jnp.transpose(x_nchw, (0, 2, 3, 1)).reshape(B, HW, C)

    gamma = params["gamma"].reshape(1, C).astype(f32)
    beta = params["beta"].reshape(1, C).astype(f32)
    # channel -> group one-hot assignment matrix (MXU-friendly group reduce).
    gmat = (jnp.arange(C)[:, None] // (C // G)
            == jnp.arange(G)[None, :]).astype(f32)                          # (C, G)
    gmat_t = gmat.T                                                         # (G, C)

    # Fused q|k|v weight; attention scale 1/sqrt(C) folded into the q columns.
    inv_sqrt_c = 1.0 / math.sqrt(C)
    wqkv = jnp.concatenate(
        [params["wq"].T * inv_sqrt_c, params["wk"].T, params["wv"].T],
        axis=1).astype(bf16)                                                # (C, 3C)
    bqkv = jnp.concatenate(
        [params["bq"] * inv_sqrt_c, params["bk"], params["bv"]]
    ).reshape(1, 3 * C).astype(f32)                                         # (1, 3C)
    wp = params["wp"].T.astype(bf16)                                        # (C, C)
    bp = params["bp"].reshape(1, C).astype(f32)

    # NOTE: the constant weight/bias blocks could be single-buffered via
    # pipeline_mode=pl.Buffered(1) to save a few MiB of VMEM at C=512; left at
    # the default double-buffering here for maximum portability.

    # ---- pass 1: GroupNorm statistics -> per-channel scale/shift ------------
    est1 = 2 * HW * C * 4 + 2 * (C * G * 4) * 2 + 8 * C * 4
    vmem1 = int(min(max(2 * est1, 8 << 20), 64 << 20))
    scale, shift = pl.pallas_call(
        groupnorm_stats_kernel,
        out_shape=(jax.ShapeDtypeStruct((B, 1, C), f32),
                   jax.ShapeDtypeStruct((B, 1, C), f32)),
        grid=(B,),
        in_specs=[
            pl.BlockSpec((1, HW, C), lambda b: (b, 0, 0)),   # x
            pl.BlockSpec((1, C), lambda b: (0, 0)),          # gamma
            pl.BlockSpec((1, C), lambda b: (0, 0)),          # beta
            pl.BlockSpec((C, G), lambda b: (0, 0)),          # gmat
            pl.BlockSpec((G, C), lambda b: (0, 0)),          # gmat_t
        ],
        out_specs=(pl.BlockSpec((1, 1, C), lambda b: (b, 0, 0)),
                   pl.BlockSpec((1, 1, C), lambda b: (b, 0, 0))),
        compiler_params=pltpu.CompilerParams(
            dimension_semantics=("parallel",),
            vmem_limit_bytes=vmem1),
        cost_estimate=pl.CostEstimate(
            flops=int(4 * B * HW * C),
            transcendentals=int(B * G),
            bytes_accessed=int(B * HW * C * 4 + 2 * B * C * 4)),
    )(x_seq, gamma, beta, gmat, gmat_t)

    # ---- pass 2: normalize + fused QKV projection (bf16 outputs) ------------
    est2 = (2 * TQ * C * 4            # x tile (double buffered)
            + 3 * 2 * TQ * C * 2      # q/k/v output tiles
            + 2 * 3 * C * C * 2       # fused weight
            + 2 * 3 * C * 4 + 4 * C * 4)
    vmem2 = int(min(max(2 * est2, 8 << 20), 64 << 20))
    q, k, v = pl.pallas_call(
        qkv_project_kernel,
        out_shape=(jax.ShapeDtypeStruct((B, HW, C), bf16),
                   jax.ShapeDtypeStruct((B, HW, C), bf16),
                   jax.ShapeDtypeStruct((B, HW, C), bf16)),
        grid=(B, nq),
        in_specs=[
            pl.BlockSpec((1, TQ, C), lambda b, i: (b, i, 0)),    # x
            pl.BlockSpec((1, 1, C), lambda b, i: (b, 0, 0)),     # scale
            pl.BlockSpec((1, 1, C), lambda b, i: (b, 0, 0)),     # shift
            pl.BlockSpec((C, 3 * C), lambda b, i: (0, 0)),       # wqkv (bf16)
            pl.BlockSpec((1, 3 * C), lambda b, i: (0, 0)),       # bqkv
        ],
        out_specs=(pl.BlockSpec((1, TQ, C), lambda b, i: (b, i, 0)),
                   pl.BlockSpec((1, TQ, C), lambda b, i: (b, i, 0)),
                   pl.BlockSpec((1, TQ, C), lambda b, i: (b, i, 0))),
        compiler_params=pltpu.CompilerParams(
            dimension_semantics=("parallel", "parallel"),
            vmem_limit_bytes=vmem2),
        cost_estimate=pl.CostEstimate(
            flops=int(2 * B * HW * C * 3 * C),
            transcendentals=0,
            bytes_accessed=int(B * HW * C * 4 + 3 * B * HW * C * 2
                               + 3 * C * C * 2)),
    )(x_seq, scale, shift, wqkv, bqkv)

    # ---- pass 3: flash attention + proj_out + residual ----------------------
    est3 = (2 * TQ * C * 4            # x (residual)
            + 2 * TQ * C * 2          # q
            + 2 * 2 * TKV * C * 2     # k, v
            + 2 * C * C * 2           # wp
            + 2 * TQ * C * 4          # out
            + TQ * C * 4 + 2 * TQ * 4)  # scratch
    vmem3 = int(min(max(2 * est3, 8 << 20), 64 << 20))
    out_seq = pl.pallas_call(
        flash_attn_kernel,
        out_shape=jax.ShapeDtypeStruct((B, HW, C), f32),
        grid=(B, nq, nkv),
        in_specs=[
            pl.BlockSpec((1, TQ, C), lambda b, qi, ki: (b, qi, 0)),   # x (residual)
            pl.BlockSpec((1, TQ, C), lambda b, qi, ki: (b, qi, 0)),   # q
            pl.BlockSpec((1, TKV, C), lambda b, qi, ki: (b, ki, 0)),  # k
            pl.BlockSpec((1, TKV, C), lambda b, qi, ki: (b, ki, 0)),  # v
            pl.BlockSpec((C, C), lambda b, qi, ki: (0, 0)),           # wp (bf16)
            pl.BlockSpec((1, C), lambda b, qi, ki: (0, 0)),           # bp
        ],
        out_specs=pl.BlockSpec((1, TQ, C), lambda b, qi, ki: (b, qi, 0)),
        scratch_shapes=[
            pltpu.VMEM((TQ, 1), f32),   # running max  m
            pltpu.VMEM((TQ, 1), f32),   # running sum  l
            pltpu.VMEM((TQ, C), f32),   # un-normalized PV accumulator
        ],
        compiler_params=pltpu.CompilerParams(
            dimension_semantics=("parallel", "parallel", "arbitrary"),
            vmem_limit_bytes=vmem3),
        cost_estimate=pl.CostEstimate(
            flops=int(B * (4 * HW * HW * C + 2 * HW * C * C)),
            transcendentals=int(B * HW * HW),
            bytes_accessed=int(B * HW * C * (4 + 2 + 4)
                               + B * nq * HW * C * 2 * 2 + C * C * 2)),
    )(x_seq, q, k, v, wp, bp)

    # glue: (B, HW, C) -> NCHW
    return jnp.transpose(out_seq.reshape(B, H, W, C), (0, 3, 1, 2))


# --------------- pure-JAX reference (mirrors the torch forward) --------------
def attn_block_ref(x, params):
    B, C, H, W = x.shape
    G = NUM_GROUPS
    hi = jax.lax.Precision.HIGHEST
    xg = x.reshape(B, G, C // G, H, W)
    mean = xg.mean(axis=(2, 3, 4), keepdims=True)
    var = xg.var(axis=(2, 3, 4), keepdims=True)
    hn = (xg - mean) / jnp.sqrt(var + EPS)
    hn = hn.reshape(B, C, H, W)
    hn = hn * params["gamma"].reshape(1, C, 1, 1) + params["beta"].reshape(1, C, 1, 1)

    def conv1x1(h, w, b):
        return jnp.einsum("bchw,oc->bohw", h, w, precision=hi) + b.reshape(1, -1, 1, 1)

    q = conv1x1(hn, params["wq"], params["bq"])
    k = conv1x1(hn, params["wk"], params["bk"])
    v = conv1x1(hn, params["wv"], params["bv"])
    to_seq = lambda t: jnp.transpose(t, (0, 2, 3, 1)).reshape(B, H * W, C)
    qs, ks, vs = map(to_seq, (q, k, v))
    scores = jnp.einsum("bqc,bkc->bqk", qs, ks, precision=hi) / math.sqrt(C)
    attn = jax.nn.softmax(scores, axis=-1)
    out = jnp.einsum("bqk,bkc->bqc", attn, vs, precision=hi)
    out = jnp.transpose(out.reshape(B, H, W, C), (0, 3, 1, 2))
    proj = conv1x1(out, params["wp"], params["bp"])
    return x + proj


if __name__ == "__main__":
    # C divisible by 32 (GroupNorm) and lane-dense (=128); HW=256 -> 2x2 flash tiles.
    B, C, H, W = 2, 128, 16, 16

    key = jax.random.PRNGKey(0)
    ks = jax.random.split(key, 11)
    params = {
        "gamma": 1.0 + 0.1 * jax.random.normal(ks[0], (C,), jnp.float32),
        "beta": 0.1 * jax.random.normal(ks[1], (C,), jnp.float32),
        "wq": 0.1 * jax.random.normal(ks[2], (C, C), jnp.float32),
        "bq": 0.1 * jax.random.normal(ks[3], (C,), jnp.float32),
        "wk": 0.1 * jax.random.normal(ks[4], (C, C), jnp.float32),
        "bk": 0.1 * jax.random.normal(ks[5], (C,), jnp.float32),
        "wv": 0.1 * jax.random.normal(ks[6], (C, C), jnp.float32),
        "bv": 0.1 * jax.random.normal(ks[7], (C,), jnp.float32),
        "wp": 0.1 * jax.random.normal(ks[8], (C, C), jnp.float32),
        "bp": 0.1 * jax.random.normal(ks[9], (C,), jnp.float32),
    }
    x = jax.random.normal(ks[10], (B, C, H, W), jnp.float32)

    y = jax.block_until_ready(attn_block(x, params))
    y_ref = jax.block_until_ready(attn_block_ref(x, params))

    assert y.shape == x.shape and y.dtype == x.dtype
    max_err = float(jnp.max(jnp.abs(y - y_ref)))
    # bf16 MXU operands (f32 accumulation) vs. an all-f32 reference -> ~1e-2 scale
    # differences are expected; 3e-2 comfortably bounds them at these magnitudes.
    assert jnp.allclose(y, y_ref, rtol=3e-2, atol=3e-2), max_err
    print("KERNEL_OK")
</pallas_src>

<mosaic_0001>
module attributes {stable_mosaic.version = 11 : i64} {
  func.func @groupnorm_stats_kernel(%arg0: i32, %arg1: memref<1x256x128xf32, #tpu.memory_space<vmem>>, %arg2: memref<1x128xf32, #tpu.memory_space<vmem>>, %arg3: memref<1x128xf32, #tpu.memory_space<vmem>>, %arg4: memref<128x32xf32, #tpu.memory_space<vmem>>, %arg5: memref<32x128xf32, #tpu.memory_space<vmem>>, %arg6: memref<1x1x128xf32, #tpu.memory_space<vmem>>, %arg7: memref<1x1x128xf32, #tpu.memory_space<vmem>>) attributes {dimension_semantics = [#tpu.dimension_semantics<parallel>], iteration_bounds = array<i64: 2>, scalar_prefetch = 0 : i64, scratch_operands = 0 : i64, tpu.core_type = #tpu.core_type<tc>, window_params = [{transform_indices = @transform_0, window_bounds = array<i64: 1, 256, 128>}, {pipeline_mode = #tpu.pipeline_mode<synchronous>, transform_indices = @transform_1, window_bounds = array<i64: 1, 128>}, {pipeline_mode = #tpu.pipeline_mode<synchronous>, transform_indices = @transform_2, window_bounds = array<i64: 1, 128>}, {pipeline_mode = #tpu.pipeline_mode<synchronous>, transform_indices = @transform_3, window_bounds = array<i64: 128, 32>}, {pipeline_mode = #tpu.pipeline_mode<synchronous>, transform_indices = @transform_4, window_bounds = array<i64: 32, 128>}, {transform_indices = @transform_5, window_bounds = array<i64: 1, 1, 128>}, {transform_indices = @transform_6, window_bounds = array<i64: 1, 1, 128>}]} {
    %c0 = arith.constant 0 : index
    %c0_0 = arith.constant 0 : index
    %c0_1 = arith.constant 0 : index
    %0 = vector.load %arg1[%c0, %c0_0, %c0_1] : memref<1x256x128xf32, #tpu.memory_space<vmem>>, vector<1x256x128xf32>
    %1 = vector.shape_cast %0 : vector<1x256x128xf32> to vector<256x128xf32>
    %cst = arith.constant dense<0.000000e+00> : vector<128xf32>
    %2 = vector.multi_reduction <add>, %1, %cst [0] : vector<256x128xf32> to vector<128xf32>
    %3 = vector.shape_cast %2 : vector<128xf32> to vector<1x128xf32>
    %c0_2 = arith.constant 0 : index
    %c0_3 = arith.constant 0 : index
    %4 = vector.load %arg4[%c0_2, %c0_3] : memref<128x32xf32, #tpu.memory_space<vmem>>, vector<128x32xf32>
    %cst_4 = arith.constant dense<0.000000e+00> : vector<1x32xf32>
    %5 = tpu.matmul %3, %4, %cst_4 {dimension_numbers = #tpu.dot_dimension_numbers<[1], [0], [0], [1], [0, 0, 1, 1], [], []>, precision = #tpu.contract_precision<fp32>} : vector<1x128xf32>, vector<128x32xf32>, vector<1x32xf32> -> vector<1x32xf32>
    %cst_5 = arith.constant 1.024000e+03 : f32
    %6 = vector.broadcast %cst_5 : f32 to vector<1x32xf32>
    %7 = arith.divf %5, %6 : vector<1x32xf32>
    %c0_6 = arith.constant 0 : index
    %c0_7 = arith.constant 0 : index
    %8 = vector.load %arg5[%c0_6, %c0_7] : memref<32x128xf32, #tpu.memory_space<vmem>>, vector<32x128xf32>
    %cst_8 = arith.constant dense<0.000000e+00> : vector<1x128xf32>
    %9 = tpu.matmul %7, %8, %cst_8 {dimension_numbers = #tpu.dot_dimension_numbers<[1], [0], [0], [1], [0, 0, 1, 1], [], []>, precision = #tpu.contract_precision<fp32>} : vector<1x32xf32>, vector<32x128xf32>, vector<1x128xf32> -> vector<1x128xf32>
    %10 = vector.broadcast %9 : vector<1x128xf32> to vector<256x128xf32>
    %11 = arith.subf %1, %10 : vector<256x128xf32>
    %12 = arith.mulf %11, %11 : vector<256x128xf32>
    %cst_9 = arith.constant dense<0.000000e+00> : vector<128xf32>
    %13 = vector.multi_reduction <add>, %12, %cst_9 [0] : vector<256x128xf32> to vector<128xf32>
    %14 = vector.shape_cast %13 : vector<128xf32> to vector<1x128xf32>
    %c0_10 = arith.constant 0 : index
    %c0_11 = arith.constant 0 : index
    %15 = vector.load %arg4[%c0_10, %c0_11] : memref<128x32xf32, #tpu.memory_space<vmem>>, vector<128x32xf32>
    %cst_12 = arith.constant dense<0.000000e+00> : vector<1x32xf32>
    %16 = tpu.matmul %14, %15, %cst_12 {dimension_numbers = #tpu.dot_dimension_numbers<[1], [0], [0], [1], [0, 0, 1, 1], [], []>, precision = #tpu.contract_precision<fp32>} : vector<1x128xf32>, vector<128x32xf32>, vector<1x32xf32> -> vector<1x32xf32>
    %cst_13 = arith.constant 1.024000e+03 : f32
    %17 = vector.broadcast %cst_13 : f32 to vector<1x32xf32>
    %18 = arith.divf %16, %17 : vector<1x32xf32>
    %cst_14 = arith.constant 9.99999997E-7 : f32
    %19 = vector.broadcast %cst_14 : f32 to vector<1x32xf32>
    %20 = arith.addf %18, %19 : vector<1x32xf32>
    %21 = math.rsqrt %20 : vector<1x32xf32>
    %c0_15 = arith.constant 0 : index
    %c0_16 = arith.constant 0 : index
    %22 = vector.load %arg5[%c0_15, %c0_16] : memref<32x128xf32, #tpu.memory_space<vmem>>, vector<32x128xf32>
    %cst_17 = arith.constant dense<0.000000e+00> : vector<1x128xf32>
    %23 = tpu.matmul %21, %22, %cst_17 {dimension_numbers = #tpu.dot_dimension_numbers<[1], [0], [0], [1], [0, 0, 1, 1], [], []>, precision = #tpu.contract_precision<fp32>} : vector<1x32xf32>, vector<32x128xf32>, vector<1x128xf32> -> vector<1x128xf32>
    %c0_18 = arith.constant 0 : index
    %c0_19 = arith.constant 0 : index
    %24 = vector.load %arg2[%c0_18, %c0_19] : memref<1x128xf32, #tpu.memory_space<vmem>>, vector<1x128xf32>
    %25 = arith.mulf %23, %24 : vector<1x128xf32>
    %c0_20 = arith.constant 0 : index
    %c0_21 = arith.constant 0 : index
    %26 = vector.load %arg3[%c0_20, %c0_21] : memref<1x128xf32, #tpu.memory_space<vmem>>, vector<1x128xf32>
    %27 = arith.mulf %9, %25 : vector<1x128xf32>
    %28 = arith.subf %26, %27 : vector<1x128xf32>
    %c0_22 = arith.constant 0 : index
    %c0_23 = arith.constant 0 : index
    %c0_24 = arith.constant 0 : index
    %29 = vector.load %arg6[%c0_22, %c0_23, %c0_24] : memref<1x1x128xf32, #tpu.memory_space<vmem>>, vector<1x1x128xf32>
    %30 = vector.shape_cast %29 : vector<1x1x128xf32> to vector<1x128xf32>
    %31 = vector.shape_cast %25 : vector<1x128xf32> to vector<1x1x128xf32>
    tpu.vector_store %arg6[%c0_22, %c0_23, %c0_24], %31 {strides = array<i32>} : memref<1x1x128xf32, #tpu.memory_space<vmem>>, vector<1x1x128xf32>,
    %c0_25 = arith.constant 0 : index
    %c0_26 = arith.constant 0 : index
    %c0_27 = arith.constant 0 : index
    %32 = vector.load %arg7[%c0_25, %c0_26, %c0_27] : memref<1x1x128xf32, #tpu.memory_space<vmem>>, vector<1x1x128xf32>
    %33 = vector.shape_cast %32 : vector<1x1x128xf32> to vector<1x128xf32>
    %34 = vector.shape_cast %28 : vector<1x128xf32> to vector<1x1x128xf32>
    tpu.vector_store %arg7[%c0_25, %c0_26, %c0_27], %34 {strides = array<i32>} : memref<1x1x128xf32, #tpu.memory_space<vmem>>, vector<1x1x128xf32>,
    return
  }
  func.func @transform_0(%arg0: i32) -> (i32, i32, i32) {
    %c0_i32 = arith.constant 0 : i32
    %c0_i32_0 = arith.constant 0 : i32
    %c0_i32_1 = arith.constant 0 : i32
    return %arg0, %c0_i32, %c0_i32_0 : i32, i32, i32
  }
  func.func @transform_1(%arg0: i32) -> (i32, i32) {
    %c0_i32 = arith.constant 0 : i32
    %c0_i32_0 = arith.constant 0 : i32
    %c0_i32_1 = arith.constant 0 : i32
    return %c0_i32, %c0_i32_0 : i32, i32
  }
  func.func @transform_2(%arg0: i32) -> (i32, i32) {
    %c0_i32 = arith.constant 0 : i32
    %c0_i32_0 = arith.constant 0 : i32
    %c0_i32_1 = arith.constant 0 : i32
    return %c0_i32, %c0_i32_0 : i32, i32
  }
  func.func @transform_3(%arg0: i32) -> (i32, i32) {
    %c0_i32 = arith.constant 0 : i32
    %c0_i32_0 = arith.constant 0 : i32
    %c0_i32_1 = arith.constant 0 : i32
    return %c0_i32, %c0_i32_0 : i32, i32
  }
  func.func @transform_4(%arg0: i32) -> (i32, i32) {
    %c0_i32 = arith.constant 0 : i32
    %c0_i32_0 = arith.constant 0 : i32
    %c0_i32_1 = arith.constant 0 : i32
    return %c0_i32, %c0_i32_0 : i32, i32
  }
  func.func @transform_5(%arg0: i32) -> (i32, i32, i32) {
    %c0_i32 = arith.constant 0 : i32
    %c0_i32_0 = arith.constant 0 : i32
    %c0_i32_1 = arith.constant 0 : i32
    return %arg0, %c0_i32, %c0_i32_0 : i32, i32, i32
  }
  func.func @transform_6(%arg0: i32) -> (i32, i32, i32) {
    %c0_i32 = arith.constant 0 : i32
    %c0_i32_0 = arith.constant 0 : i32
    %c0_i32_1 = arith.constant 0 : i32
    return %arg0, %c0_i32, %c0_i32_0 : i32, i32, i32
  }
}

</mosaic_0001>

<llo_original>
// kernel: tpu_custom_call.1
$region0: #{tpu_custom_call.1}
  #allocation0 [shape = 'u32[]', space=smem, size = 0x4, offset = 0x4, fixed_abs, tag = 'smem constant byte address 0x4 - core index']
  #allocation1 [shape = 'u32[144,128]{1,0:T(1,128)}', space=vmem, size = 0x12000, scoped, tag = 'internal scratch']
  %s0 = inlined_call_operand.hbm [shape: f32[2,256,128], index: 0, kind: input, shape index: {}]
  %s1 = inlined_call_operand.vmem [shape: f32[1,128], index: 1, kind: input, shape index: {}]
  %s2 = inlined_call_operand.vmem [shape: f32[1,128], index: 2, kind: input, shape index: {}]
  %s3 = inlined_call_operand.vmem [shape: f32[128,32], index: 3, kind: input, shape index: {}]
  %s4 = inlined_call_operand.vmem [shape: f32[32,128], index: 4, kind: input, shape index: {}]
  %s5 = inlined_call_operand.hbm [shape: f32[2,1,128], index: 5, kind: output, shape index: {0}]
  %s6 = inlined_call_operand.hbm [shape: f32[2,1,128], index: 6, kind: output, shape index: {1}]
  %7 = xla_tuple %s5, %s6
  %s8 = sld [smem:[#allocation0]]
  $region65: #{tpu_custom_call.1} parent=0
    _
  %s10 = ssub.s32 1, %s8
  %s11 = scalar_select 0, %s10, %s8
  $region1: #{tpu_custom_call.1} parent=0
    #allocation2 [shape = 'u8[262144]{0}', space=vmem, size = 0x40000, scoped, tag = 'input window, operand 0']
    #allocation3 [shape = 's32[2]{0}', space=sflag, size = 0x8, scoped, tag = 'scoped memory for tpu_custom_call.1']
    #allocation4 [shape = 's32[2]{0}', space=sflag, size = 0x8, scoped, tag = 'scoped memory for tpu_custom_call.1']
    #allocation5 [shape = 'u8[1024]{0}', space=vmem, size = 0x400, scoped, tag = 'output window, operand 0']
    #allocation6 [shape = 'u8[1024]{0}', space=vmem, size = 0x400, scoped, tag = 'output window, operand 1']
    #allocation7 [shape = 's32[2]{0}', space=sflag, size = 0x8, scoped, tag = 'scoped memory for tpu_custom_call.1']
    %12 = vsyncpa [#allocation3], 0
    %s13 = scalar_lea.sflag [#allocation3], 1
    %14 = vsyncpa %s13, 0
    %15 = vsyncpa [#allocation4], 0
    %s16 = scalar_lea.sflag [#allocation4], 1
    %17 = vsyncpa %s16, 0
    %18 = vsyncpa [#allocation7], 0
    %s19 = scalar_lea.sflag [#allocation7], 1
    %20 = vsyncpa %s19, 0
    loop: start=0, step=1, limit=4
    $region2: #{tpu_custom_call.1} parent=1 // loop_pre_header
      _
    $region3: #{tpu_custom_call.1} parent=1 // loop_header
      %s22 = sphi 0, %s26
      %p23 = scmp.ge.s32.totalorder %s22, 4
      %s32 = sphi 0, %s34
      %s35 = sphi 0, %s32
      %s36 = sphi 0, %s35
      %s52 = sphi 0, %s36
      %s56 = sphi 0, %s56
      %s58 = sphi 0, %s56
      %s59 = sphi 0, %s58
      %s73 = sphi 0, %s59
      %s77 = sphi 0, %s77
      %s79 = sphi 0, %s77
      %s80 = sphi 0, %s79
      %s94 = sphi 0, %s80
      %s98 = sphi 0, %s98
      %s100 = sphi 0, %s98
      %s101 = sphi 0, %s100
      %s115 = sphi 0, %s101
      %s119 = sphi 0, %s119
      %s121 = sphi 0, %s119
      %s122 = sphi 0, %s121
      %s136 = sphi 0, %s122
      %s142 = sphi 0, %s144
      %s145 = sphi 0, %s142
      %s146 = sphi 0, %s145
      %s162 = sphi 0, %s146
      %s168 = sphi 0, %s170
      %s171 = sphi 0, %s168
      %s172 = sphi 0, %s171
      %s188 = sphi 0, %s172
    $region4: #{tpu_custom_call.1} parent=1 // loop_header_branch
      %25 = sbr.rel (%p23) target = $region8
    $region5: #{tpu_custom_call.1} parent=1 // loop_body
      %s27 = ssub.s32 %s22, 1
      %s28 = ssub.s32 %s22, 2
      %s29 = sadd.s32 %s22, 1
      %s30 = ssub.s32 %s22, %s29
      %p31 = scmp.eq.s32.totalorder %s30, 0
      %s33 = sadd.s32 %s32, 1
      %s34 = scalar_select %p31, %s32, %s33
      %p37 = pneg %p31
      %p38 = scmp.eq.s32.totalorder %s22, 1
      %p39 = por %p37, %p38
      %p40 = scmp.ne.s32.totalorder %s32, %s35
      %p41 = scmp.eq.s32.totalorder %s22, 0
      %p42 = por %p40, %p41
      %p43 = scmp.ne.s32.totalorder %s32, %s35
      %p44 = scmp.eq.s32.totalorder %s27, 1
      %p45 = por %p43, %p44
      %p46 = scmp.ne.s32.totalorder %s35, %s36
      %p47 = scmp.eq.s32.totalorder %s27, 0
      %p48 = por %p46, %p47
      %p49 = scmp.ne.s32.totalorder %s35, %s36
      %p50 = scmp.eq.s32.totalorder %s28, 1
      %p51 = por %p49, %p50
      %p53 = scmp.ne.s32.totalorder %s36, %s52
      %p54 = scmp.eq.s32.totalorder %s28, 0
      %p55 = por %p53, %p54
      %s57 = sadd.s32 %s56, 1
      %p60 = scmp.eq.s32.totalorder %s22, 1
      %p61 = scmp.ne.s32.totalorder %s56, %s58
      %p62 = scmp.eq.s32.totalorder %s22, 0
      %p63 = por %p61, %p62
      %p64 = scmp.ne.s32.totalorder %s56, %s58
      %p65 = scmp.eq.s32.totalorder %s27, 1
      %p66 = por %p64, %p65
      %p67 = scmp.ne.s32.totalorder %s58, %s59
      %p68 = scmp.eq.s32.totalorder %s27, 0
      %p69 = por %p67, %p68
      %p70 = scmp.ne.s32.totalorder %s58, %s59
      %p71 = scmp.eq.s32.totalorder %s28, 1
      %p72 = por %p70, %p71
      %p74 = scmp.ne.s32.totalorder %s59, %s73
      %p75 = scmp.eq.s32.totalorder %s28, 0
      %p76 = por %p74, %p75
      %s78 = sadd.s32 %s77, 1
      %p81 = scmp.eq.s32.totalorder %s22, 1
      %p82 = scmp.ne.s32.totalorder %s77, %s79
      %p83 = scmp.eq.s32.totalorder %s22, 0
      %p84 = por %p82, %p83
      %p85 = scmp.ne.s32.totalorder %s77, %s79
      %p86 = scmp.eq.s32.totalorder %s27, 1
      %p87 = por %p85, %p86
      %p88 = scmp.ne.s32.totalorder %s79, %s80
      %p89 = scmp.eq.s32.totalorder %s27, 0
      %p90 = por %p88, %p89
      %p91 = scmp.ne.s32.totalorder %s79, %s80
      %p92 = scmp.eq.s32.totalorder %s28, 1
      %p93 = por %p91, %p92
      %p95 = scmp.ne.s32.totalorder %s80, %s94
      %p96 = scmp.eq.s32.totalorder %s28, 0
      %p97 = por %p95, %p96
      %s99 = sadd.s32 %s98, 1
      %p102 = scmp.eq.s32.totalorder %s22, 1
      %p103 = scmp.ne.s32.totalorder %s98, %s100
      %p104 = scmp.eq.s32.totalorder %s22, 0
      %p105 = por %p103, %p104
      %p106 = scmp.ne.s32.totalorder %s98, %s100
      %p107 = scmp.eq.s32.totalorder %s27, 1
      %p108 = por %p106, %p107
      %p109 = scmp.ne.s32.totalorder %s100, %s101
      %p110 = scmp.eq.s32.totalorder %s27, 0
      %p111 = por %p109, %p110
      %p112 = scmp.ne.s32.totalorder %s100, %s101
      %p113 = scmp.eq.s32.totalorder %s28, 1
      %p114 = por %p112, %p113
      %p116 = scmp.ne.s32.totalorder %s101, %s115
      %p117 = scmp.eq.s32.totalorder %s28, 0
      %p118 = por %p116, %p117
      %s120 = sadd.s32 %s119, 1
      %p123 = scmp.eq.s32.totalorder %s22, 1
      %p124 = scmp.ne.s32.totalorder %s119, %s121
      %p125 = scmp.eq.s32.totalorder %s22, 0
      %p126 = por %p124, %p125
      %p127 = scmp.ne.s32.totalorder %s119, %s121
      %p128 = scmp.eq.s32.totalorder %s27, 1
      %p129 = por %p127, %p128
      %p130 = scmp.ne.s32.totalorder %s121, %s122
      %p131 = scmp.eq.s32.totalorder %s27, 0
      %p132 = por %p130, %p131
      %p133 = scmp.ne.s32.totalorder %s121, %s122
      %p134 = scmp.eq.s32.totalorder %s28, 1
      %p135 = por %p133, %p134
      %p137 = scmp.ne.s32.totalorder %s122, %s136
      %p138 = scmp.eq.s32.totalorder %s28, 0
      %p139 = por %p137, %p138
      %s140 = ssub.s32 %s22, %s29
      %p141 = scmp.eq.s32.totalorder %s140, 0
      %s143 = sadd.s32 %s142, 1
      %s144 = scalar_select %p141, %s142, %s143
      %p147 = pneg %p141
      %p148 = scmp.eq.s32.totalorder %s22, 1
      %p149 = por %p147, %p148
      %p150 = scmp.ne.s32.totalorder %s142, %s145
      %p151 = scmp.eq.s32.totalorder %s22, 0
      %p152 = por %p150, %p151
      %p153 = scmp.ne.s32.totalorder %s142, %s145
      %p154 = scmp.eq.s32.totalorder %s27, 1
      %p155 = por %p153, %p154
      %p156 = scmp.ne.s32.totalorder %s145, %s146
      %p157 = scmp.eq.s32.totalorder %s27, 0
      %p158 = por %p156, %p157
      %p159 = scmp.ne.s32.totalorder %s145, %s146
      %p160 = scmp.eq.s32.totalorder %s28, 1
      %p161 = por %p159, %p160
      %p163 = scmp.ne.s32.totalorder %s146, %s162
      %p164 = scmp.eq.s32.totalorder %s28, 0
      %p165 = por %p163, %p164
      %s166 = ssub.s32 %s22, %s29
      %p167 = scmp.eq.s32.totalorder %s166, 0
      %s169 = sadd.s32 %s168, 1
      %s170 = scalar_select %p167, %s168, %s169
      %p173 = pneg %p167
      %p174 = scmp.eq.s32.totalorder %s22, 1
      %p175 = por %p173, %p174
      %p176 = scmp.ne.s32.totalorder %s168, %s171
      %p177 = scmp.eq.s32.totalorder %s22, 0
      %p178 = por %p176, %p177
      %p179 = scmp.ne.s32.totalorder %s168, %s171
      %p180 = scmp.eq.s32.totalorder %s27, 1
      %p181 = por %p179, %p180
      %p182 = scmp.ne.s32.totalorder %s171, %s172
      %p183 = scmp.eq.s32.totalorder %s27, 0
      %p184 = por %p182, %p183
      %p185 = scmp.ne.s32.totalorder %s171, %s172
      %p186 = scmp.eq.s32.totalorder %s28, 1
      %p187 = por %p185, %p186
      %p189 = scmp.ne.s32.totalorder %s172, %s188
      %p190 = scmp.eq.s32.totalorder %s28, 0
      %p191 = por %p189, %p190
      %p192 = scmp.le.s32.totalorder 1, %s22
      %p193 = scmp.lt.s32.totalorder %s22, 3
      %p194 = pnand %p192, %p193
      %p195 = pneg %p194
      // Predicated region
      $region9: #{tpu_custom_call.1} parent=5 // pred_check
        _
      $region10: #{tpu_custom_call.1} parent=5 // pred_check_branch
        %197 = sbr.rel (%p194) target = $region12
      $region11: #{tpu_custom_call.1} parent=5 // pred_region
        %s198 = ssub.s32 %s22, 1
        // Predicated region
        $region13: #{tpu_custom_call.1} parent=11 // pred_check
          %p199 = pneg %p69
        $region14: #{tpu_custom_call.1} parent=11 // pred_check_branch
          %201 = sbr.rel (%p199) target = $region16
        $region15: #{tpu_custom_call.1} parent=11 // pred_region
          _
        $region16: #{tpu_custom_call.1} parent=11 // pred_fallthru
          _
        // Predicated region
        $region17: #{tpu_custom_call.1} parent=11 // pred_check
          %p202 = pneg %p90
        $region18: #{tpu_custom_call.1} parent=11 // pred_check_branch
          %204 = sbr.rel (%p202) target = $region20
        $region19: #{tpu_custom_call.1} parent=11 // pred_region
          _
        $region20: #{tpu_custom_call.1} parent=11 // pred_fallthru
          _
        // Predicated region
        $region21: #{tpu_custom_call.1} parent=11 // pred_check
          %p205 = pneg %p111
        $region22: #{tpu_custom_call.1} parent=11 // pred_check_branch
          %207 = sbr.rel (%p205) target = $region24
        $region23: #{tpu_custom_call.1} parent=11 // pred_region
          _
        $region24: #{tpu_custom_call.1} parent=11 // pred_fallthru
          _
        // Predicated region
        $region25: #{tpu_custom_call.1} parent=11 // pred_check
          %p208 = pneg %p132
        $region26: #{tpu_custom_call.1} parent=11 // pred_check_branch
          %210 = sbr.rel (%p208) target = $region28
        $region27: #{tpu_custom_call.1} parent=11 // pred_region
          _
        $region28: #{tpu_custom_call.1} parent=11 // pred_fallthru
          _
      $region12: #{tpu_custom_call.1} parent=5 // pred_fallthru
        _
      %p211 = scmp.lt.s32.totalorder %s22, 2
      // Predicated region
      $region29: #{tpu_custom_call.1} parent=5 // pred_check
        %p212 = pneg %p211
      $region30: #{tpu_custom_call.1} parent=5 // pred_check_branch
        %214 = sbr.rel (%p212) target = $region32
      $region31: #{tpu_custom_call.1} parent=5 // pred_region
        // Predicated region
        $region33: #{tpu_custom_call.1} parent=31 // pred_check
          %p215 = pneg %p42
        $region34: #{tpu_custom_call.1} parent=31 // pred_check_branch
          %217 = sbr.rel (%p215) target = $region36
        $region35: #{tpu_custom_call.1} parent=31 // pred_region
          %s218 = sand.u32 %s32, 1
          %s219 = scalar_lea.sflag [#allocation3], %s218
          %s220 = sand.u32 %s32, 1
          %s221 = smul.addr %s220, 256
          %s222 = scalar_lea.vmem [#allocation2], %s221
          %s224 = ssub.s32 4096, 4096
          %225 = vsyncadd %s219, %s224
          %s226 = smul.addr %s22, 32
          %s227 = smul.addr %s226, 128
          %s228 = scalar_lea.hbm %s0, %s227
          %s229 = sshll.u32 %s222, 4
          %s230 = int_to_ptr.vmem [resolvable:$true] %s229
          %235 = dma.hbm_to_vmem [thread:$0]  %s228, 4096, %s230, %s219, 128, 128, 8
        $region36: #{tpu_custom_call.1} parent=31 // pred_fallthru
          _
      $region32: #{tpu_custom_call.1} parent=5 // pred_fallthru
        _
      %p236 = scmp.le.s32.totalorder 1, %s22
      %p237 = scmp.lt.s32.totalorder %s22, 3
      %p238 = pnand %p236, %p237
      %p239 = pneg %p238
      // Predicated region
      $region37: #{tpu_custom_call.1} parent=5 // pred_check
        _
      $region38: #{tpu_custom_call.1} parent=5 // pred_check_branch
        %241 = sbr.rel (%p238) target = $region40
      $region39: #{tpu_custom_call.1} parent=5 // pred_region
        %s242 = ssub.s32 %s22, 1
        %s243 = sand.u32 %s35, 1
        %s244 = scalar_lea.sflag [#allocation3], %s243
        %s245 = sand.u32 %s35, 1
        %s246 = smul.addr %s245, 256
        %s247 = scalar_lea.vmem [#allocation2], %s246
        // Predicated region
        $region41: #{tpu_custom_call.1} parent=39 // pred_check
          %p248 = pneg %p48
        $region42: #{tpu_custom_call.1} parent=39 // pred_check_branch
          %250 = sbr.rel (%p248) target = $region44
        $region43: #{tpu_custom_call.1} parent=39 // pred_region
          %251 = dma.done %s244, 4096
        $region44: #{tpu_custom_call.1} parent=39 // pred_fallthru
          _
        %s252 = sand.u32 %s35, 1
        %s253 = scalar_lea.sflag [#allocation3], %s252
        %s254 = sand.u32 %s35, 1
        %s255 = smul.addr %s254, 256
        %s256 = scalar_lea.vmem [#allocation2], %s255
        %p257 = pneg %p48
        %p258 = pneg %p45
        %p259 = pneg %p69
        %p260 = pneg %p66
        %p261 = pneg %p90
        %p262 = pneg %p87
        %p263 = pneg %p111
        %p264 = pneg %p108
        %p265 = pneg %p132
        %p266 = pneg %p129
        %p267 = pneg %p158
        %p268 = pneg %p155
        %s269 = sand.u32 %s145, 1
        %s270 = scalar_lea.sflag [#allocation4], %s269
        %s271 = sand.u32 %s145, 1
        %s272 = scalar_lea.vmem [#allocation5], %s271
        %p273 = pneg %p184
        %p274 = pneg %p181
        %s275 = sand.u32 %s171, 1
        %s276 = scalar_lea.sflag [#allocation7], %s275
        %s277 = sand.u32 %s171, 1
        %s278 = scalar_lea.vmem [#allocation6], %s277
        %v279 = vld [vmem:[%s247] sm:$0xff]
        %v280 = vld [vmem:[%s247 + $0x8] sm:$0xff]
        %v281 = vld [vmem:[%s247 + $0x10] sm:$0xff]
        %v282 = vld [vmem:[%s247 + $0x18] sm:$0xff]
        %v283 = vld [vmem:[%s247 + $0x20] sm:$0xff]
        %v284 = vld [vmem:[%s247 + $0x28] sm:$0xff]
        %v285 = vld [vmem:[%s247 + $0x30] sm:$0xff]
        %v286 = vld [vmem:[%s247 + $0x38] sm:$0xff]
        %v287 = vld [vmem:[%s247 + $0x40] sm:$0xff]
        %v288 = vld [vmem:[%s247 + $0x48] sm:$0xff]
        %v289 = vld [vmem:[%s247 + $0x50] sm:$0xff]
        %v290 = vld [vmem:[%s247 + $0x58] sm:$0xff]
        %v291 = vld [vmem:[%s247 + $0x60] sm:$0xff]
        %v292 = vld [vmem:[%s247 + $0x68] sm:$0xff]
        %v293 = vld [vmem:[%s247 + $0x70] sm:$0xff]
        %v294 = vld [vmem:[%s247 + $0x78] sm:$0xff]
        %v295 = vld [vmem:[%s247 + $0x80] sm:$0xff]
        %v296 = vld [vmem:[%s247 + $0x88] sm:$0xff]
        %v297 = vld [vmem:[%s247 + $0x90] sm:$0xff]
        %v298 = vld [vmem:[%s247 + $0x98] sm:$0xff]
        %v299 = vld [vmem:[%s247 + $0xa0] sm:$0xff]
        %v300 = vld [vmem:[%s247 + $0xa8] sm:$0xff]
        %v301 = vld [vmem:[%s247 + $0xb0] sm:$0xff]
        %v302 = vld [vmem:[%s247 + $0xb8] sm:$0xff]
        %v303 = vld [vmem:[%s247 + $0xc0] sm:$0xff]
        %v304 = vld [vmem:[%s247 + $0xc8] sm:$0xff]
        %v305 = vld [vmem:[%s247 + $0xd0] sm:$0xff]
        %v306 = vld [vmem:[%s247 + $0xd8] sm:$0xff]
        %v307 = vld [vmem:[%s247 + $0xe0] sm:$0xff]
        %v308 = vld [vmem:[%s247 + $0xe8] sm:$0xff]
        %v309 = vld [vmem:[%s247 + $0xf0] sm:$0xff]
        %v310 = vld [vmem:[%s247 + $0xf8] sm:$0xff]
        %v311 = vadd.f32 %v279, %v280
        %v312 = vadd.f32 %v311, %v281
        %v313 = vadd.f32 %v312, %v282
        %v314 = vadd.f32 %v313, %v283
        %v315 = vadd.f32 %v314, %v284
        %v316 = vadd.f32 %v315, %v285
        %v317 = vadd.f32 %v316, %v286
        %v318 = vadd.f32 %v317, %v287
        %v319 = vadd.f32 %v318, %v288
        %v320 = vadd.f32 %v319, %v289
        %v321 = vadd.f32 %v320, %v290
        %v322 = vadd.f32 %v321, %v291
        %v323 = vadd.f32 %v322, %v292
        %v324 = vadd.f32 %v323, %v293
        %v325 = vadd.f32 %v324, %v294
        %v326 = vadd.f32 %v325, %v295
        %v327 = vadd.f32 %v326, %v296
        %v328 = vadd.f32 %v327, %v297
        %v329 = vadd.f32 %v328, %v298
        %v330 = vadd.f32 %v329, %v299
        %v331 = vadd.f32 %v330, %v300
        %v332 = vadd.f32 %v331, %v301
        %v333 = vadd.f32 %v332, %v302
        %v334 = vadd.f32 %v333, %v303
        %v335 = vadd.f32 %v334, %v304
        %v336 = vadd.f32 %v335, %v305
        %v337 = vadd.f32 %v336, %v306
        %v338 = vadd.f32 %v337, %v307
        %v339 = vadd.f32 %v338, %v308
        %v340 = vadd.f32 %v339, %v309
        %v341 = vadd.f32 %v340, %v310
        %v342 = vrot.slane %v341, 4
        %v343 = vadd.f32 %v341, %v342
        %v344 = vrot.slane %v343, 2
        %v345 = vadd.f32 %v343, %v344
        %v346 = vrot.slane %v345, 1
        %v347 = vadd.f32 %v345, %v346
        %v348 = vld [vmem:[%s3] sm:$0xff]
        %v349 = vld [vmem:[%s3 + $0x8] sm:$0xff]
        %v350 = vld [vmem:[%s3 + $0x10] sm:$0xff]
        %v351 = vld [vmem:[%s3 + $0x18] sm:$0xff]
        %v352 = vld [vmem:[%s3 + $0x20] sm:$0xff]
        %v353 = vld [vmem:[%s3 + $0x28] sm:$0xff]
        %v354 = vld [vmem:[%s3 + $0x30] sm:$0xff]
        %v355 = vld [vmem:[%s3 + $0x38] sm:$0xff]
        %v356 = vld [vmem:[%s3 + $0x40] sm:$0xff]
        %v357 = vld [vmem:[%s3 + $0x48] sm:$0xff]
        %v358 = vld [vmem:[%s3 + $0x50] sm:$0xff]
        %v359 = vld [vmem:[%s3 + $0x58] sm:$0xff]
        %v360 = vld [vmem:[%s3 + $0x60] sm:$0xff]
        %v361 = vld [vmem:[%s3 + $0x68] sm:$0xff]
        %v362 = vld [vmem:[%s3 + $0x70] sm:$0xff]
        %v363 = vld [vmem:[%s3 + $0x78] sm:$0xff]
        %364 = vmatprep.subr.mxu0 0.0
        %v365 = vand.u32 %v363, 4294901760
        %366 = vmatpush1.msra.mxu0 %v365
        %367 = vmatprep.subr.mxu0 0.0
        %v368 = vand.u32 %v362, 4294901760
        %369 = vmatpush1.msra.mxu0 %v368
        %370 = vmatprep.subr.mxu0 0.0
        %v371 = vand.u32 %v361, 4294901760
        %372 = vmatpush1.msra.mxu0 %v371
        %373 = vmatprep.subr.mxu0 0.0
        %v374 = vand.u32 %v360, 4294901760
        %375 = vmatpush1.msra.mxu0 %v374
        %376 = vmatprep.subr.mxu0 0.0
        %v377 = vand.u32 %v359, 4294901760
        %378 = vmatpush1.msra.mxu0 %v377
        %379 = vmatprep.subr.mxu0 0.0
        %v380 = vand.u32 %v358, 4294901760
        %381 = vmatpush1.msra.mxu0 %v380
        %382 = vmatprep.subr.mxu0 0.0
        %v383 = vand.u32 %v357, 4294901760
        %384 = vmatpush1.msra.mxu0 %v383
        %385 = vmatprep.subr.mxu0 0.0
        %v386 = vand.u32 %v356, 4294901760
        %387 = vmatpush1.msra.mxu0 %v386
        %388 = vmatprep.subr.mxu0 0.0
        %v389 = vand.u32 %v355, 4294901760
        %390 = vmatpush1.msra.mxu0 %v389
        %391 = vmatprep.subr.mxu0 0.0
        %v392 = vand.u32 %v354, 4294901760
        %393 = vmatpush1.msra.mxu0 %v392
        %394 = vmatprep.subr.mxu0 0.0
        %v395 = vand.u32 %v353, 4294901760
        %396 = vmatpush1.msra.mxu0 %v395
        %397 = vmatprep.subr.mxu0 0.0
        %v398 = vand.u32 %v352, 4294901760
        %399 = vmatpush1.msra.mxu0 %v398
        %400 = vmatprep.subr.mxu0 0.0
        %v401 = vand.u32 %v351, 4294901760
        %402 = vmatpush1.msra.mxu0 %v401
        %403 = vmatprep.subr.mxu0 0.0
        %v404 = vand.u32 %v350, 4294901760
        %405 = vmatpush1.msra.mxu0 %v404
        %406 = vmatprep.subr.mxu0 0.0
        %v407 = vand.u32 %v349, 4294901760
        %408 = vmatpush1.msra.mxu0 %v407
        %409 = vmatprep.subr.mxu0 0.0
        %v410 = vand.u32 %v348, 4294901760
        %411 = vmatpush1.msra.mxu0 %v410
        %412 = vmatprep.subr.mxu0 0.0
        %413 = vmatpush2.msra.mxu0 0.0
        %414 = vmatprep.subr.mxu0 0.0
        %415 = vmatpush2.msra.mxu0 0.0
        %416 = vmatprep.subr.mxu0 0.0
        %417 = vmatpush2.msra.mxu0 0.0
        %418 = vmatprep.subr.mxu0 0.0
        %419 = vmatpush2.msra.mxu0 0.0
        %420 = vmatprep.subr.mxu0 0.0
        %421 = vmatpush2.msra.mxu0 0.0
        %422 = vmatprep.subr.mxu0 0.0
        %423 = vmatpush2.msra.mxu0 0.0
        %424 = vmatprep.subr.mxu0 0.0
        %425 = vmatpush2.msra.mxu0 0.0
        %426 = vmatprep.subr.mxu0 0.0
        %427 = vmatpush2.msra.mxu0 0.0
        %428 = vmatprep.subr.mxu0 0.0
        %429 = vmatpush2.msra.mxu0 0.0
        %430 = vmatprep.subr.mxu0 0.0
        %431 = vmatpush2.msra.mxu0 0.0
        %432 = vmatprep.subr.mxu0 0.0
        %433 = vmatpush2.msra.mxu0 0.0
        %434 = vmatprep.subr.mxu0 0.0
        %435 = vmatpush2.msra.mxu0 0.0
        %436 = vmatprep.subr.mxu0 0.0
        %437 = vmatpush2.msra.mxu0 0.0
        %438 = vmatprep.subr.mxu0 0.0
        %439 = vmatpush2.msra.mxu0 0.0
        %440 = vmatprep.subr.mxu0 0.0
        %441 = vmatpush2.msra.mxu0 0.0
        %442 = vmatprep.subr.mxu0 0.0
        %443 = vmatpush2.msra.mxu0 0.0
        %444 = vmatprep.mubr.f32.mxu0 0.0
        %v445 = vand.u32 %v347, 4294901760
        %v446 = vsub.f32 %v347, %v445
        %v447 = vand.u32 %v446, 4294901760
        %v448 = vsub.f32 %v446, %v447
        %v449 = vand.u32 %v448, 4294901760
        %450 = vmatmul.mubr.f32.gmra.mxu0 %v449
        %v451 = vpop.f32.mrf.mxu0
        %v452 = vadd.f32 0.0, %v451
        %v453 = vpop.f32.mrf.mxu0
        %454 = vdwg.mxu0
        %455 = vmatprep.subr.mxu0 0.0
        %v456 = vand.u32 %v363, 4294901760
        %v457 = vsub.f32 %v363, %v456
        %v458 = vand.u32 %v457, 4294901760
        %v459 = vsub.f32 %v457, %v458
        %v460 = vand.u32 %v459, 4294901760
        %461 = vmatpush1.msra.mxu0 %v460
        %462 = vmatprep.subr.mxu0 0.0
        %v463 = vand.u32 %v362, 4294901760
        %v464 = vsub.f32 %v362, %v463
        %v465 = vand.u32 %v464, 4294901760
        %v466 = vsub.f32 %v464, %v465
        %v467 = vand.u32 %v466, 4294901760
        %468 = vmatpush1.msra.mxu0 %v467
        %469 = vmatprep.subr.mxu0 0.0
        %v470 = vand.u32 %v361, 4294901760
        %v471 = vsub.f32 %v361, %v470
        %v472 = vand.u32 %v471, 4294901760
        %v473 = vsub.f32 %v471, %v472
        %v474 = vand.u32 %v473, 4294901760
        %475 = vmatpush1.msra.mxu0 %v474
        %476 = vmatprep.subr.mxu0 0.0
        %v477 = vand.u32 %v360, 4294901760
        %v478 = vsub.f32 %v360, %v477
        %v479 = vand.u32 %v478, 4294901760
        %v480 = vsub.f32 %v478, %v479
        %v481 = vand.u32 %v480, 4294901760
        %482 = vmatpush1.msra.mxu0 %v481
        %483 = vmatprep.subr.mxu0 0.0
        %v484 = vand.u32 %v359, 4294901760
        %v485 = vsub.f32 %v359, %v484
        %v486 = vand.u32 %v485, 4294901760
        %v487 = vsub.f32 %v485, %v486
        %v488 = vand.u32 %v487, 4294901760
        %489 = vmatpush1.msra.mxu0 %v488
        %490 = vmatprep.subr.mxu0 0.0
        %v491 = vand.u32 %v358, 4294901760
        %v492 = vsub.f32 %v358, %v491
        %v493 = vand.u32 %v492, 4294901760
        %v494 = vsub.f32 %v492, %v493
        %v495 = vand.u32 %v494, 4294901760
        %496 = vmatpush1.msra.mxu0 %v495
        %497 = vmatprep.subr.mxu0 0.0
        %v498 = vand.u32 %v357, 4294901760
        %v499 = vsub.f32 %v357, %v498
        %v500 = vand.u32 %v499, 4294901760
        %v501 = vsub.f32 %v499, %v500
        %v502 = vand.u32 %v501, 4294901760
        %503 = vmatpush1.msra.mxu0 %v502
        %504 = vmatprep.subr.mxu0 0.0
        %v505 = vand.u32 %v356, 4294901760
        %v506 = vsub.f32 %v356, %v505
        %v507 = vand.u32 %v506, 4294901760
        %v508 = vsub.f32 %v506, %v507
        %v509 = vand.u32 %v508, 4294901760
        %510 = vmatpush1.msra.mxu0 %v509
        %511 = vmatprep.subr.mxu0 0.0
        %v512 = vand.u32 %v355, 4294901760
        %v513 = vsub.f32 %v355, %v512
        %v514 = vand.u32 %v513, 4294901760
        %v515 = vsub.f32 %v513, %v514
        %v516 = vand.u32 %v515, 4294901760
        %517 = vmatpush1.msra.mxu0 %v516
        %518 = vmatprep.subr.mxu0 0.0
        %v519 = vand.u32 %v354, 4294901760
        %v520 = vsub.f32 %v354, %v519
        %v521 = vand.u32 %v520, 4294901760
        %v522 = vsub.f32 %v520, %v521
        %v523 = vand.u32 %v522, 4294901760
        %524 = vmatpush1.msra.mxu0 %v523
        %525 = vmatprep.subr.mxu0 0.0
        %v526 = vand.u32 %v353, 4294901760
        %v527 = vsub.f32 %v353, %v526
        %v528 = vand.u32 %v527, 4294901760
        %v529 = vsub.f32 %v527, %v528
        %v530 = vand.u32 %v529, 4294901760
        %531 = vmatpush1.msra.mxu0 %v530
        %532 = vmatprep.subr.mxu0 0.0
        %v533 = vand.u32 %v352, 4294901760
        %v534 = vsub.f32 %v352, %v533
        %v535 = vand.u32 %v534, 4294901760
        %v536 = vsub.f32 %v534, %v535
        %v537 = vand.u32 %v536, 4294901760
        %538 = vmatpush1.msra.mxu0 %v537
        %539 = vmatprep.subr.mxu0 0.0
        %v540 = vand.u32 %v351, 4294901760
        %v541 = vsub.f32 %v351, %v540
        %v542 = vand.u32 %v541, 4294901760
        %v543 = vsub.f32 %v541, %v542
        %v544 = vand.u32 %v543, 4294901760
        %545 = vmatpush1.msra.mxu0 %v544
        %546 = vmatprep.subr.mxu0 0.0
        %v547 = vand.u32 %v350, 4294901760
        %v548 = vsub.f32 %v350, %v547
        %v549 = vand.u32 %v548, 4294901760
        %v550 = vsub.f32 %v548, %v549
        %v551 = vand.u32 %v550, 4294901760
        %552 = vmatpush1.msra.mxu0 %v551
        %553 = vmatprep.subr.mxu0 0.0
        %v554 = vand.u32 %v349, 4294901760
        %v555 = vsub.f32 %v349, %v554
        %v556 = vand.u32 %v555, 4294901760
        %v557 = vsub.f32 %v555, %v556
        %v558 = vand.u32 %v557, 4294901760
        %559 = vmatpush1.msra.mxu0 %v558
        %560 = vmatprep.subr.mxu0 0.0
        %v561 = vand.u32 %v348, 4294901760
        %v562 = vsub.f32 %v348, %v561
        %v563 = vand.u32 %v562, 4294901760
        %v564 = vsub.f32 %v562, %v563
        %v565 = vand.u32 %v564, 4294901760
        %566 = vmatpush1.msra.mxu0 %v565
        %567 = vmatprep.subr.mxu0 0.0
        %568 = vmatpush2.msra.mxu0 0.0
        %569 = vmatprep.subr.mxu0 0.0
        %570 = vmatpush2.msra.mxu0 0.0
        %571 = vmatprep.subr.mxu0 0.0
        %572 = vmatpush2.msra.mxu0 0.0
        %573 = vmatprep.subr.mxu0 0.0
        %574 = vmatpush2.msra.mxu0 0.0
        %575 = vmatprep.subr.mxu0 0.0
        %576 = vmatpush2.msra.mxu0 0.0
        %577 = vmatprep.subr.mxu0 0.0
        %578 = vmatpush2.msra.mxu0 0.0
        %579 = vmatprep.subr.mxu0 0.0
        %580 = vmatpush2.msra.mxu0 0.0
        %581 = vmatprep.subr.mxu0 0.0
        %582 = vmatpush2.msra.mxu0 0.0
        %583 = vmatprep.subr.mxu0 0.0
        %584 = vmatpush2.msra.mxu0 0.0
        %585 = vmatprep.subr.mxu0 0.0
        %586 = vmatpush2.msra.mxu0 0.0
        %587 = vmatprep.subr.mxu0 0.0
        %588 = vmatpush2.msra.mxu0 0.0
        %589 = vmatprep.subr.mxu0 0.0
        %590 = vmatpush2.msra.mxu0 0.0
        %591 = vmatprep.subr.mxu0 0.0
        %592 = vmatpush2.msra.mxu0 0.0
        %593 = vmatprep.subr.mxu0 0.0
        %594 = vmatpush2.msra.mxu0 0.0
        %595 = vmatprep.subr.mxu0 0.0
        %596 = vmatpush2.msra.mxu0 0.0
        %597 = vmatprep.subr.mxu0 0.0
        %598 = vmatpush2.msra.mxu0 0.0
        %599 = vmatprep.mubr.f32.mxu0 0.0
        %v600 = vand.u32 %v347, 4294901760
        %601 = vmatmul.mubr.f32.gmra.mxu0 %v600
        %v602 = vpop.f32.mrf.mxu0
        %v603 = vadd.f32 %v452, %v602
        %v604 = vpop.f32.mrf.mxu0
        %605 = vdwg.mxu0
        %606 = vmatprep.subr.mxu0 0.0
        %v607 = vand.u32 %v363, 4294901760
        %v608 = vsub.f32 %v363, %v607
        %609 = vmatpush1.msra.mxu0 %v608
        %610 = vmatprep.subr.mxu0 0.0
        %v611 = vand.u32 %v362, 4294901760
        %v612 = vsub.f32 %v362, %v611
        %613 = vmatpush1.msra.mxu0 %v612
        %614 = vmatprep.subr.mxu0 0.0
        %v615 = vand.u32 %v361, 4294901760
        %v616 = vsub.f32 %v361, %v615
        %617 = vmatpush1.msra.mxu0 %v616
        %618 = vmatprep.subr.mxu0 0.0
        %v619 = vand.u32 %v360, 4294901760
        %v620 = vsub.f32 %v360, %v619
        %621 = vmatpush1.msra.mxu0 %v620
        %622 = vmatprep.subr.mxu0 0.0
        %v623 = vand.u32 %v359, 4294901760
        %v624 = vsub.f32 %v359, %v623
        %625 = vmatpush1.msra.mxu0 %v624
        %626 = vmatprep.subr.mxu0 0.0
        %v627 = vand.u32 %v358, 4294901760
        %v628 = vsub.f32 %v358, %v627
        %629 = vmatpush1.msra.mxu0 %v628
        %630 = vmatprep.subr.mxu0 0.0
        %v631 = vand.u32 %v357, 4294901760
        %v632 = vsub.f32 %v357, %v631
        %633 = vmatpush1.msra.mxu0 %v632
        %634 = vmatprep.subr.mxu0 0.0
        %v635 = vand.u32 %v356, 4294901760
        %v636 = vsub.f32 %v356, %v635
        %637 = vmatpush1.msra.mxu0 %v636
        %638 = vmatprep.subr.mxu0 0.0
        %v639 = vand.u32 %v355, 4294901760
        %v640 = vsub.f32 %v355, %v639
        %641 = vmatpush1.msra.mxu0 %v640
        %642 = vmatprep.subr.mxu0 0.0
        %v643 = vand.u32 %v354, 4294901760
        %v644 = vsub.f32 %v354, %v643
        %645 = vmatpush1.msra.mxu0 %v644
        %646 = vmatprep.subr.mxu0 0.0
        %v647 = vand.u32 %v353, 4294901760
        %v648 = vsub.f32 %v353, %v647
        %649 = vmatpush1.msra.mxu0 %v648
        %650 = vmatprep.subr.mxu0 0.0
        %v651 = vand.u32 %v352, 4294901760
        %v652 = vsub.f32 %v352, %v651
        %653 = vmatpush1.msra.mxu0 %v652
        %654 = vmatprep.subr.mxu0 0.0
        %v655 = vand.u32 %v351, 4294901760
        %v656 = vsub.f32 %v351, %v655
        %657 = vmatpush1.msra.mxu0 %v656
        %658 = vmatprep.subr.mxu0 0.0
        %v659 = vand.u32 %v350, 4294901760
        %v660 = vsub.f32 %v350, %v659
        %661 = vmatpush1.msra.mxu0 %v660
        %662 = vmatprep.subr.mxu0 0.0
        %v663 = vand.u32 %v349, 4294901760
        %v664 = vsub.f32 %v349, %v663
        %665 = vmatpush1.msra.mxu0 %v664
        %666 = vmatprep.subr.mxu0 0.0
        %v667 = vand.u32 %v348, 4294901760
        %v668 = vsub.f32 %v348, %v667
        %669 = vmatpush1.msra.mxu0 %v668
        %670 = vmatprep.subr.mxu0 0.0
        %671 = vmatpush2.msra.mxu0 0.0
        %672 = vmatprep.subr.mxu0 0.0
        %673 = vmatpush2.msra.mxu0 0.0
        %674 = vmatprep.subr.mxu0 0.0
        %675 = vmatpush2.msra.mxu0 0.0
        %676 = vmatprep.subr.mxu0 0.0
        %677 = vmatpush2.msra.mxu0 0.0
        %678 = vmatprep.subr.mxu0 0.0
        %679 = vmatpush2.msra.mxu0 0.0
        %680 = vmatprep.subr.mxu0 0.0
        %681 = vmatpush2.msra.mxu0 0.0
        %682 = vmatprep.subr.mxu0 0.0
        %683 = vmatpush2.msra.mxu0 0.0
        %684 = vmatprep.subr.mxu0 0.0
        %685 = vmatpush2.msra.mxu0 0.0
        %686 = vmatprep.subr.mxu0 0.0
        %687 = vmatpush2.msra.mxu0 0.0
        %688 = vmatprep.subr.mxu0 0.0
        %689 = vmatpush2.msra.mxu0 0.0
        %690 = vmatprep.subr.mxu0 0.0
        %691 = vmatpush2.msra.mxu0 0.0
        %692 = vmatprep.subr.mxu0 0.0
        %693 = vmatpush2.msra.mxu0 0.0
        %694 = vmatprep.subr.mxu0 0.0
        %695 = vmatpush2.msra.mxu0 0.0
        %696 = vmatprep.subr.mxu0 0.0
        %697 = vmatpush2.msra.mxu0 0.0
        %698 = vmatprep.subr.mxu0 0.0
        %699 = vmatpush2.msra.mxu0 0.0
        %700 = vmatprep.subr.mxu0 0.0
        %701 = vmatpush2.msra.mxu0 0.0
        %702 = vmatprep.mubr.f32.mxu0 0.0
        %v703 = vand.u32 %v347, 4294901760
        %v704 = vsub.f32 %v347, %v703
        %705 = vmatmul.mubr.f32.gmra.mxu0 %v704
        %v706 = vpop.f32.mrf.mxu0
        %v707 = vadd.f32 %v603, %v706
        %v708 = vpop.f32.mrf.mxu0
        %709 = vdwg.mxu0
        %710 = vmatprep.subr.mxu0 0.0
        %v711 = vand.u32 %v363, 4294901760
        %712 = vmatpush1.msra.mxu0 %v711
        %713 = vmatprep.subr.mxu0 0.0
        %v714 = vand.u32 %v362, 4294901760
        %715 = vmatpush1.msra.mxu0 %v714
        %716 = vmatprep.subr.mxu0 0.0
        %v717 = vand.u32 %v361, 4294901760
        %718 = vmatpush1.msra.mxu0 %v717
        %719 = vmatprep.subr.mxu0 0.0
        %v720 = vand.u32 %v360, 4294901760
        %721 = vmatpush1.msra.mxu0 %v720
        %722 = vmatprep.subr.mxu0 0.0
        %v723 = vand.u32 %v359, 4294901760
        %724 = vmatpush1.msra.mxu0 %v723
        %725 = vmatprep.subr.mxu0 0.0
        %v726 = vand.u32 %v358, 4294901760
        %727 = vmatpush1.msra.mxu0 %v726
        %728 = vmatprep.subr.mxu0 0.0
        %v729 = vand.u32 %v357, 4294901760
        %730 = vmatpush1.msra.mxu0 %v729
        %731 = vmatprep.subr.mxu0 0.0
        %v732 = vand.u32 %v356, 4294901760
        %733 = vmatpush1.msra.mxu0 %v732
        %734 = vmatprep.subr.mxu0 0.0
        %v735 = vand.u32 %v355, 4294901760
        %736 = vmatpush1.msra.mxu0 %v735
        %737 = vmatprep.subr.mxu0 0.0
        %v738 = vand.u32 %v354, 4294901760
        %739 = vmatpush1.msra.mxu0 %v738
        %740 = vmatprep.subr.mxu0 0.0
        %v741 = vand.u32 %v353, 4294901760
        %742 = vmatpush1.msra.mxu0 %v741
        %743 = vmatprep.subr.mxu0 0.0
        %v744 = vand.u32 %v352, 4294901760
        %745 = vmatpush1.msra.mxu0 %v744
        %746 = vmatprep.subr.mxu0 0.0
        %v747 = vand.u32 %v351, 4294901760
        %748 = vmatpush1.msra.mxu0 %v747
        %749 = vmatprep.subr.mxu0 0.0
        %v750 = vand.u32 %v350, 4294901760
        %751 = vmatpush1.msra.mxu0 %v750
        %752 = vmatprep.subr.mxu0 0.0
        %v753 = vand.u32 %v349, 4294901760
        %754 = vmatpush1.msra.mxu0 %v753
        %755 = vmatprep.subr.mxu0 0.0
        %v756 = vand.u32 %v348, 4294901760
        %757 = vmatpush1.msra.mxu0 %v756
        %758 = vmatprep.subr.mxu0 0.0
        %759 = vmatpush2.msra.mxu0 0.0
        %760 = vmatprep.subr.mxu0 0.0
        %761 = vmatpush2.msra.mxu0 0.0
        %762 = vmatprep.subr.mxu0 0.0
        %763 = vmatpush2.msra.mxu0 0.0
        %764 = vmatprep.subr.mxu0 0.0
        %765 = vmatpush2.msra.mxu0 0.0
        %766 = vmatprep.subr.mxu0 0.0
        %767 = vmatpush2.msra.mxu0 0.0
        %768 = vmatprep.subr.mxu0 0.0
        %769 = vmatpush2.msra.mxu0 0.0
        %770 = vmatprep.subr.mxu0 0.0
        %771 = vmatpush2.msra.mxu0 0.0
        %772 = vmatprep.subr.mxu0 0.0
        %773 = vmatpush2.msra.mxu0 0.0
        %774 = vmatprep.subr.mxu0 0.0
        %775 = vmatpush2.msra.mxu0 0.0
        %776 = vmatprep.subr.mxu0 0.0
        %777 = vmatpush2.msra.mxu0 0.0
        %778 = vmatprep.subr.mxu0 0.0
        %779 = vmatpush2.msra.mxu0 0.0
        %780 = vmatprep.subr.mxu0 0.0
        %781 = vmatpush2.msra.mxu0 0.0
        %782 = vmatprep.subr.mxu0 0.0
        %783 = vmatpush2.msra.mxu0 0.0
        %784 = vmatprep.subr.mxu0 0.0
        %785 = vmatpush2.msra.mxu0 0.0
        %786 = vmatprep.subr.mxu0 0.0
        %787 = vmatpush2.msra.mxu0 0.0
        %788 = vmatprep.subr.mxu0 0.0
        %789 = vmatpush2.msra.mxu0 0.0
        %790 = vmatprep.mubr.f32.mxu0 0.0
        %v791 = vand.u32 %v347, 4294901760
        %v792 = vsub.f32 %v347, %v791
        %v793 = vand.u32 %v792, 4294901760
        %794 = vmatmul.mubr.f32.gmra.mxu0 %v793
        %v795 = vpop.f32.mrf.mxu0
        %v796 = vadd.f32 %v707, %v795
        %v797 = vpop.f32.mrf.mxu0
        %798 = vdwg.mxu0
        %799 = vmatprep.subr.mxu0 0.0
        %v800 = vand.u32 %v363, 4294901760
        %v801 = vsub.f32 %v363, %v800
        %v802 = vand.u32 %v801, 4294901760
        %803 = vmatpush1.msra.mxu0 %v802
        %804 = vmatprep.subr.mxu0 0.0
        %v805 = vand.u32 %v362, 4294901760
        %v806 = vsub.f32 %v362, %v805
        %v807 = vand.u32 %v806, 4294901760
        %808 = vmatpush1.msra.mxu0 %v807
        %809 = vmatprep.subr.mxu0 0.0
        %v810 = vand.u32 %v361, 4294901760
        %v811 = vsub.f32 %v361, %v810
        %v812 = vand.u32 %v811, 4294901760
        %813 = vmatpush1.msra.mxu0 %v812
        %814 = vmatprep.subr.mxu0 0.0
        %v815 = vand.u32 %v360, 4294901760
        %v816 = vsub.f32 %v360, %v815
        %v817 = vand.u32 %v816, 4294901760
        %818 = vmatpush1.msra.mxu0 %v817
        %819 = vmatprep.subr.mxu0 0.0
        %v820 = vand.u32 %v359, 4294901760
        %v821 = vsub.f32 %v359, %v820
        %v822 = vand.u32 %v821, 4294901760
        %823 = vmatpush1.msra.mxu0 %v822
        %824 = vmatprep.subr.mxu0 0.0
        %v825 = vand.u32 %v358, 4294901760
        %v826 = vsub.f32 %v358, %v825
        %v827 = vand.u32 %v826, 4294901760
        %828 = vmatpush1.msra.mxu0 %v827
        %829 = vmatprep.subr.mxu0 0.0
        %v830 = vand.u32 %v357, 4294901760
        %v831 = vsub.f32 %v357, %v830
        %v832 = vand.u32 %v831, 4294901760
        %833 = vmatpush1.msra.mxu0 %v832
        %834 = vmatprep.subr.mxu0 0.0
        %v835 = vand.u32 %v356, 4294901760
        %v836 = vsub.f32 %v356, %v835
        %v837 = vand.u32 %v836, 4294901760
        %838 = vmatpush1.msra.mxu0 %v837
        %839 = vmatprep.subr.mxu0 0.0
        %v840 = vand.u32 %v355, 4294901760
        %v841 = vsub.f32 %v355, %v840
        %v842 = vand.u32 %v841, 4294901760
        %843 = vmatpush1.msra.mxu0 %v842
        %844 = vmatprep.subr.mxu0 0.0
        %v845 = vand.u32 %v354, 4294901760
        %v846 = vsub.f32 %v354, %v845
        %v847 = vand.u32 %v846, 4294901760
        %848 = vmatpush1.msra.mxu0 %v847
        %849 = vmatprep.subr.mxu0 0.0
        %v850 = vand.u32 %v353, 4294901760
        %v851 = vsub.f32 %v353, %v850
        %v852 = vand.u32 %v851, 4294901760
        %853 = vmatpush1.msra.mxu0 %v852
        %854 = vmatprep.subr.mxu0 0.0
        %v855 = vand.u32 %v352, 4294901760
        %v856 = vsub.f32 %v352, %v855
        %v857 = vand.u32 %v856, 4294901760
        %858 = vmatpush1.msra.mxu0 %v857
        %859 = vmatprep.subr.mxu0 0.0
        %v860 = vand.u32 %v351, 4294901760
        %v861 = vsub.f32 %v351, %v860
        %v862 = vand.u32 %v861, 4294901760
        %863 = vmatpush1.msra.mxu0 %v862
        %864 = vmatprep.subr.mxu0 0.0
        %v865 = vand.u32 %v350, 4294901760
        %v866 = vsub.f32 %v350, %v865
        %v867 = vand.u32 %v866, 4294901760
        %868 = vmatpush1.msra.mxu0 %v867
        %869 = vmatprep.subr.mxu0 0.0
        %v870 = vand.u32 %v349, 4294901760
        %v871 = vsub.f32 %v349, %v870
        %v872 = vand.u32 %v871, 4294901760
        %873 = vmatpush1.msra.mxu0 %v872
        %874 = vmatprep.subr.mxu0 0.0
        %v875 = vand.u32 %v348, 4294901760
        %v876 = vsub.f32 %v348, %v875
        %v877 = vand.u32 %v876, 4294901760
        %878 = vmatpush1.msra.mxu0 %v877
        %879 = vmatprep.subr.mxu0 0.0
        %880 = vmatpush2.msra.mxu0 0.0
        %881 = vmatprep.subr.mxu0 0.0
        %882 = vmatpush2.msra.mxu0 0.0
        %883 = vmatprep.subr.mxu0 0.0
        %884 = vmatpush2.msra.mxu0 0.0
        %885 = vmatprep.subr.mxu0 0.0
        %886 = vmatpush2.msra.mxu0 0.0
        %887 = vmatprep.subr.mxu0 0.0
        %888 = vmatpush2.msra.mxu0 0.0
        %889 = vmatprep.subr.mxu0 0.0
        %890 = vmatpush2.msra.mxu0 0.0
        %891 = vmatprep.subr.mxu0 0.0
        %892 = vmatpush2.msra.mxu0 0.0
        %893 = vmatprep.subr.mxu0 0.0
        %894 = vmatpush2.msra.mxu0 0.0
        %895 = vmatprep.subr.mxu0 0.0
        %896 = vmatpush2.msra.mxu0 0.0
        %897 = vmatprep.subr.mxu0 0.0
        %898 = vmatpush2.msra.mxu0 0.0
        %899 = vmatprep.subr.mxu0 0.0
        %900 = vmatpush2.msra.mxu0 0.0
        %901 = vmatprep.subr.mxu0 0.0
        %902 = vmatpush2.msra.mxu0 0.0
        %903 = vmatprep.subr.mxu0 0.0
        %904 = vmatpush2.msra.mxu0 0.0
        %905 = vmatprep.subr.mxu0 0.0
        %906 = vmatpush2.msra.mxu0 0.0
        %907 = vmatprep.subr.mxu0 0.0
        %908 = vmatpush2.msra.mxu0 0.0
        %909 = vmatprep.subr.mxu0 0.0
        %910 = vmatpush2.msra.mxu0 0.0
        %911 = vmatprep.mubr.f32.mxu0 0.0
        %v912 = vand.u32 %v347, 4294901760
        %913 = vmatmul.mubr.f32.gmra.mxu0 %v912
        %v914 = vpop.f32.mrf.mxu0
        %v915 = vadd.f32 %v796, %v914
        %v916 = vpop.f32.mrf.mxu0
        %917 = vdwg.mxu0
        %918 = vmatprep.subr.mxu0 0.0
        %v919 = vand.u32 %v363, 4294901760
        %920 = vmatpush1.msra.mxu0 %v919
        %921 = vmatprep.subr.mxu0 0.0
        %v922 = vand.u32 %v362, 4294901760
        %923 = vmatpush1.msra.mxu0 %v922
        %924 = vmatprep.subr.mxu0 0.0
        %v925 = vand.u32 %v361, 4294901760
        %926 = vmatpush1.msra.mxu0 %v925
        %927 = vmatprep.subr.mxu0 0.0
        %v928 = vand.u32 %v360, 4294901760
        %929 = vmatpush1.msra.mxu0 %v928
        %930 = vmatprep.subr.mxu0 0.0
        %v931 = vand.u32 %v359, 4294901760
        %932 = vmatpush1.msra.mxu0 %v931
        %933 = vmatprep.subr.mxu0 0.0
        %v934 = vand.u32 %v358, 4294901760
        %935 = vmatpush1.msra.mxu0 %v934
        %936 = vmatprep.subr.mxu0 0.0
        %v937 = vand.u32 %v357, 4294901760
        %938 = vmatpush1.msra.mxu0 %v937
        %939 = vmatprep.subr.mxu0 0.0
        %v940 = vand.u32 %v356, 4294901760
        %941 = vmatpush1.msra.mxu0 %v940
        %942 = vmatprep.subr.mxu0 0.0
        %v943 = vand.u32 %v355, 4294901760
        %944 = vmatpush1.msra.mxu0 %v943
        %945 = vmatprep.subr.mxu0 0.0
        %v946 = vand.u32 %v354, 4294901760
        %947 = vmatpush1.msra.mxu0 %v946
        %948 = vmatprep.subr.mxu0 0.0
        %v949 = vand.u32 %v353, 4294901760
        %950 = vmatpush1.msra.mxu0 %v949
        %951 = vmatprep.subr.mxu0 0.0
        %v952 = vand.u32 %v352, 4294901760
        %953 = vmatpush1.msra.mxu0 %v952
        %954 = vmatprep.subr.mxu0 0.0
        %v955 = vand.u32 %v351, 4294901760
        %956 = vmatpush1.msra.mxu0 %v955
        %957 = vmatprep.subr.mxu0 0.0
        %v958 = vand.u32 %v350, 4294901760
        %959 = vmatpush1.msra.mxu0 %v958
        %960 = vmatprep.subr.mxu0 0.0
        %v961 = vand.u32 %v349, 4294901760
        %962 = vmatpush1.msra.mxu0 %v961
        %963 = vmatprep.subr.mxu0 0.0
        %v964 = vand.u32 %v348, 4294901760
        %965 = vmatpush1.msra.mxu0 %v964
        %966 = vmatprep.subr.mxu0 0.0
        %967 = vmatpush2.msra.mxu0 0.0
        %968 = vmatprep.subr.mxu0 0.0
        %969 = vmatpush2.msra.mxu0 0.0
        %970 = vmatprep.subr.mxu0 0.0
        %971 = vmatpush2.msra.mxu0 0.0
        %972 = vmatprep.subr.mxu0 0.0
        %973 = vmatpush2.msra.mxu0 0.0
        %974 = vmatprep.subr.mxu0 0.0
        %975 = vmatpush2.msra.mxu0 0.0
        %976 = vmatprep.subr.mxu0 0.0
        %977 = vmatpush2.msra.mxu0 0.0
        %978 = vmatprep.subr.mxu0 0.0
        %979 = vmatpush2.msra.mxu0 0.0
        %980 = vmatprep.subr.mxu0 0.0
        %981 = vmatpush2.msra.mxu0 0.0
        %982 = vmatprep.subr.mxu0 0.0
        %983 = vmatpush2.msra.mxu0 0.0
        %984 = vmatprep.subr.mxu0 0.0
        %985 = vmatpush2.msra.mxu0 0.0
        %986 = vmatprep.subr.mxu0 0.0
        %987 = vmatpush2.msra.mxu0 0.0
        %988 = vmatprep.subr.mxu0 0.0
        %989 = vmatpush2.msra.mxu0 0.0
        %990 = vmatprep.subr.mxu0 0.0
        %991 = vmatpush2.msra.mxu0 0.0
        %992 = vmatprep.subr.mxu0 0.0
        %993 = vmatpush2.msra.mxu0 0.0
        %994 = vmatprep.subr.mxu0 0.0
        %995 = vmatpush2.msra.mxu0 0.0
        %996 = vmatprep.subr.mxu0 0.0
        %997 = vmatpush2.msra.mxu0 0.0
        %998 = vmatprep.mubr.f32.mxu0 0.0
        %v999 = vand.u32 %v347, 4294901760
        %1000 = vmatmul.mubr.f32.gmra.mxu0 %v999
        %v1001 = vpop.f32.mrf.mxu0
        %v1002 = vadd.f32 %v915, %v1001
        %v1003 = vpop.f32.mrf.mxu0
        %1004 = vdwg.mxu0
        %v1005 = vrcp.pop 1024.0
        %v1006 = vmul.f32 %v1002, %v1005
        %v1007 = vld [vmem:[%s4] sm:$0xff]
        %v1008 = vld [vmem:[%s4 + $0x8] sm:$0xff]
        %v1009 = vld [vmem:[%s4 + $0x10] sm:$0xff]
        %v1010 = vld [vmem:[%s4 + $0x18] sm:$0xff]
        %vm1011 = vcmask 261120
        %v1013 = vsel %vm1011, %v1006, 0
        %1015 = vmatprep.subr.mxu0 0.0
        %1016 = vmatpush1.msra.mxu0 0.0
        %1017 = vmatprep.subr.mxu0 0.0
        %1018 = vmatpush1.msra.mxu0 0.0
        %1019 = vmatprep.subr.mxu0 0.0
        %1020 = vmatpush1.msra.mxu0 0.0
        %1021 = vmatprep.subr.mxu0 0.0
        %1022 = vmatpush1.msra.mxu0 0.0
        %1023 = vmatprep.subr.mxu0 0.0
        %1024 = vmatpush1.msra.mxu0 0.0
        %1025 = vmatprep.subr.mxu0 0.0
        %1026 = vmatpush1.msra.mxu0 0.0
        %1027 = vmatprep.subr.mxu0 0.0
        %1028 = vmatpush1.msra.mxu0 0.0
        %1029 = vmatprep.subr.mxu0 0.0
        %1030 = vmatpush1.msra.mxu0 0.0
        %1031 = vmatprep.subr.mxu0 0.0
        %1032 = vmatpush1.msra.mxu0 0.0
        %1033 = vmatprep.subr.mxu0 0.0
        %1034 = vmatpush1.msra.mxu0 0.0
        %1035 = vmatprep.subr.mxu0 0.0
        %1036 = vmatpush1.msra.mxu0 0.0
        %1037 = vmatprep.subr.mxu0 0.0
        %1038 = vmatpush1.msra.mxu0 0.0
        %1039 = vmatprep.subr.mxu0 0.0
        %v1040 = vand.u32 %v1010, 4294901760
        %1041 = vmatpush1.msra.mxu0 %v1040
        %1042 = vmatprep.subr.mxu0 0.0
        %v1043 = vand.u32 %v1009, 4294901760
        %1044 = vmatpush1.msra.mxu0 %v1043
        %1045 = vmatprep.subr.mxu0 0.0
        %v1046 = vand.u32 %v1008, 4294901760
        %1047 = vmatpush1.msra.mxu0 %v1046
        %1048 = vmatprep.subr.mxu0 0.0
        %v1049 = vand.u32 %v1007, 4294901760
        %1050 = vmatpush1.msra.mxu0 %v1049
        %1051 = vmatprep.subr.mxu0 0.0
        %1052 = vmatpush2.msra.mxu0 0.0
        %1053 = vmatprep.subr.mxu0 0.0
        %1054 = vmatpush2.msra.mxu0 0.0
        %1055 = vmatprep.subr.mxu0 0.0
        %1056 = vmatpush2.msra.mxu0 0.0
        %1057 = vmatprep.subr.mxu0 0.0
        %1058 = vmatpush2.msra.mxu0 0.0
        %1059 = vmatprep.subr.mxu0 0.0
        %1060 = vmatpush2.msra.mxu0 0.0
        %1061 = vmatprep.subr.mxu0 0.0
        %1062 = vmatpush2.msra.mxu0 0.0
        %1063 = vmatprep.subr.mxu0 0.0
        %1064 = vmatpush2.msra.mxu0 0.0
        %1065 = vmatprep.subr.mxu0 0.0
        %1066 = vmatpush2.msra.mxu0 0.0
        %1067 = vmatprep.subr.mxu0 0.0
        %1068 = vmatpush2.msra.mxu0 0.0
        %1069 = vmatprep.subr.mxu0 0.0
        %1070 = vmatpush2.msra.mxu0 0.0
        %1071 = vmatprep.subr.mxu0 0.0
        %1072 = vmatpush2.msra.mxu0 0.0
        %1073 = vmatprep.subr.mxu0 0.0
        %1074 = vmatpush2.msra.mxu0 0.0
        %1075 = vmatprep.subr.mxu0 0.0
        %1076 = vmatpush2.msra.mxu0 0.0
        %1077 = vmatprep.subr.mxu0 0.0
        %1078 = vmatpush2.msra.mxu0 0.0
        %1079 = vmatprep.subr.mxu0 0.0
        %1080 = vmatpush2.msra.mxu0 0.0
        %1081 = vmatprep.subr.mxu0 0.0
        %1082 = vmatpush2.msra.mxu0 0.0
        %1083 = vmatprep.mubr.f32.mxu0 0.0
        %v1084 = vand.u32 %v1013, 4294901760
        %v1085 = vsub.f32 %v1013, %v1084
        %v1086 = vand.u32 %v1085, 4294901760
        %v1087 = vsub.f32 %v1085, %v1086
        %v1088 = vand.u32 %v1087, 4294901760
        %1089 = vmatmul.mubr.f32.gmra.mxu0 %v1088
        %v1090 = vpop.f32.mrf.mxu0
        %v1091 = vadd.f32 0.0, %v1090
        %v1092 = vpop.f32.mrf.mxu0
        %1093 = vdwg.mxu0
        %1094 = vmatprep.subr.mxu0 0.0
        %1095 = vmatpush1.msra.mxu0 0.0
        %1096 = vmatprep.subr.mxu0 0.0
        %1097 = vmatpush1.msra.mxu0 0.0
        %1098 = vmatprep.subr.mxu0 0.0
        %1099 = vmatpush1.msra.mxu0 0.0
        %1100 = vmatprep.subr.mxu0 0.0
        %1101 = vmatpush1.msra.mxu0 0.0
        %1102 = vmatprep.subr.mxu0 0.0
        %1103 = vmatpush1.msra.mxu0 0.0
        %1104 = vmatprep.subr.mxu0 0.0
        %1105 = vmatpush1.msra.mxu0 0.0
        %1106 = vmatprep.subr.mxu0 0.0
        %1107 = vmatpush1.msra.mxu0 0.0
        %1108 = vmatprep.subr.mxu0 0.0
        %1109 = vmatpush1.msra.mxu0 0.0
        %1110 = vmatprep.subr.mxu0 0.0
        %1111 = vmatpush1.msra.mxu0 0.0
        %1112 = vmatprep.subr.mxu0 0.0
        %1113 = vmatpush1.msra.mxu0 0.0
        %1114 = vmatprep.subr.mxu0 0.0
        %1115 = vmatpush1.msra.mxu0 0.0
        %1116 = vmatprep.subr.mxu0 0.0
        %1117 = vmatpush1.msra.mxu0 0.0
        %1118 = vmatprep.subr.mxu0 0.0
        %v1119 = vand.u32 %v1010, 4294901760
        %v1120 = vsub.f32 %v1010, %v1119
        %v1121 = vand.u32 %v1120, 4294901760
        %v1122 = vsub.f32 %v1120, %v1121
        %v1123 = vand.u32 %v1122, 4294901760
        %1124 = vmatpush1.msra.mxu0 %v1123
        %1125 = vmatprep.subr.mxu0 0.0
        %v1126 = vand.u32 %v1009, 4294901760
        %v1127 = vsub.f32 %v1009, %v1126
        %v1128 = vand.u32 %v1127, 4294901760
        %v1129 = vsub.f32 %v1127, %v1128
        %v1130 = vand.u32 %v1129, 4294901760
        %1131 = vmatpush1.msra.mxu0 %v1130
        %1132 = vmatprep.subr.mxu0 0.0
        %v1133 = vand.u32 %v1008, 4294901760
        %v1134 = vsub.f32 %v1008, %v1133
        %v1135 = vand.u32 %v1134, 4294901760
        %v1136 = vsub.f32 %v1134, %v1135
        %v1137 = vand.u32 %v1136, 4294901760
        %1138 = vmatpush1.msra.mxu0 %v1137
        %1139 = vmatprep.subr.mxu0 0.0
        %v1140 = vand.u32 %v1007, 4294901760
        %v1141 = vsub.f32 %v1007, %v1140
        %v1142 = vand.u32 %v1141, 4294901760
        %v1143 = vsub.f32 %v1141, %v1142
        %v1144 = vand.u32 %v1143, 4294901760
        %1145 = vmatpush1.msra.mxu0 %v1144
        %1146 = vmatprep.subr.mxu0 0.0
        %1147 = vmatpush2.msra.mxu0 0.0
        %1148 = vmatprep.subr.mxu0 0.0
        %1149 = vmatpush2.msra.mxu0 0.0
        %1150 = vmatprep.subr.mxu0 0.0
        %1151 = vmatpush2.msra.mxu0 0.0
        %1152 = vmatprep.subr.mxu0 0.0
        %1153 = vmatpush2.msra.mxu0 0.0
        %1154 = vmatprep.subr.mxu0 0.0
        %1155 = vmatpush2.msra.mxu0 0.0
        %1156 = vmatprep.subr.mxu0 0.0
        %1157 = vmatpush2.msra.mxu0 0.0
        %1158 = vmatprep.subr.mxu0 0.0
        %1159 = vmatpush2.msra.mxu0 0.0
        %1160 = vmatprep.subr.mxu0 0.0
        %1161 = vmatpush2.msra.mxu0 0.0
        %1162 = vmatprep.subr.mxu0 0.0
        %1163 = vmatpush2.msra.mxu0 0.0
        %1164 = vmatprep.subr.mxu0 0.0
        %1165 = vmatpush2.msra.mxu0 0.0
        %1166 = vmatprep.subr.mxu0 0.0
        %1167 = vmatpush2.msra.mxu0 0.0
        %1168 = vmatprep.subr.mxu0 0.0
        %1169 = vmatpush2.msra.mxu0 0.0
        %1170 = vmatprep.subr.mxu0 0.0
        %1171 = vmatpush2.msra.mxu0 0.0
        %1172 = vmatprep.subr.mxu0 0.0
        %1173 = vmatpush2.msra.mxu0 0.0
        %1174 = vmatprep.subr.mxu0 0.0
        %1175 = vmatpush2.msra.mxu0 0.0
        %1176 = vmatprep.subr.mxu0 0.0
        %1177 = vmatpush2.msra.mxu0 0.0
        %1178 = vmatprep.mubr.f32.mxu0 0.0
        %v1179 = vand.u32 %v1013, 4294901760
        %1180 = vmatmul.mubr.f32.gmra.mxu0 %v1179
        %v1181 = vpop.f32.mrf.mxu0
        %v1182 = vadd.f32 %v1091, %v1181
        %v1183 = vpop.f32.mrf.mxu0
        %1184 = vdwg.mxu0
        %1185 = vmatprep.subr.mxu0 0.0
        %1186 = vmatpush1.msra.mxu0 0.0
        %1187 = vmatprep.subr.mxu0 0.0
        %1188 = vmatpush1.msra.mxu0 0.0
        %1189 = vmatprep.subr.mxu0 0.0
        %1190 = vmatpush1.msra.mxu0 0.0
        %1191 = vmatprep.subr.mxu0 0.0
        %1192 = vmatpush1.msra.mxu0 0.0
        %1193 = vmatprep.subr.mxu0 0.0
        %1194 = vmatpush1.msra.mxu0 0.0
        %1195 = vmatprep.subr.mxu0 0.0
        %1196 = vmatpush1.msra.mxu0 0.0
        %1197 = vmatprep.subr.mxu0 0.0
        %1198 = vmatpush1.msra.mxu0 0.0
        %1199 = vmatprep.subr.mxu0 0.0
        %1200 = vmatpush1.msra.mxu0 0.0
        %1201 = vmatprep.subr.mxu0 0.0
        %1202 = vmatpush1.msra.mxu0 0.0
        %1203 = vmatprep.subr.mxu0 0.0
        %1204 = vmatpush1.msra.mxu0 0.0
        %1205 = vmatprep.subr.mxu0 0.0
        %1206 = vmatpush1.msra.mxu0 0.0
        %1207 = vmatprep.subr.mxu0 0.0
        %1208 = vmatpush1.msra.mxu0 0.0
        %1209 = vmatprep.subr.mxu0 0.0
        %v1210 = vand.u32 %v1010, 4294901760
        %v1211 = vsub.f32 %v1010, %v1210
        %1212 = vmatpush1.msra.mxu0 %v1211
        %1213 = vmatprep.subr.mxu0 0.0
        %v1214 = vand.u32 %v1009, 4294901760
        %v1215 = vsub.f32 %v1009, %v1214
        %1216 = vmatpush1.msra.mxu0 %v1215
        %1217 = vmatprep.subr.mxu0 0.0
        %v1218 = vand.u32 %v1008, 4294901760
        %v1219 = vsub.f32 %v1008, %v1218
        %1220 = vmatpush1.msra.mxu0 %v1219
        %1221 = vmatprep.subr.mxu0 0.0
        %v1222 = vand.u32 %v1007, 4294901760
        %v1223 = vsub.f32 %v1007, %v1222
        %1224 = vmatpush1.msra.mxu0 %v1223
        %1225 = vmatprep.subr.mxu0 0.0
        %1226 = vmatpush2.msra.mxu0 0.0
        %1227 = vmatprep.subr.mxu0 0.0
        %1228 = vmatpush2.msra.mxu0 0.0
        %1229 = vmatprep.subr.mxu0 0.0
        %1230 = vmatpush2.msra.mxu0 0.0
        %1231 = vmatprep.subr.mxu0 0.0
        %1232 = vmatpush2.msra.mxu0 0.0
        %1233 = vmatprep.subr.mxu0 0.0
        %1234 = vmatpush2.msra.mxu0 0.0
        %1235 = vmatprep.subr.mxu0 0.0
        %1236 = vmatpush2.msra.mxu0 0.0
        %1237 = vmatprep.subr.mxu0 0.0
        %1238 = vmatpush2.msra.mxu0 0.0
        %1239 = vmatprep.subr.mxu0 0.0
        %1240 = vmatpush2.msra.mxu0 0.0
        %1241 = vmatprep.subr.mxu0 0.0
        %1242 = vmatpush2.msra.mxu0 0.0
        %1243 = vmatprep.subr.mxu0 0.0
        %1244 = vmatpush2.msra.mxu0 0.0
        %1245 = vmatprep.subr.mxu0 0.0
        %1246 = vmatpush2.msra.mxu0 0.0
        %1247 = vmatprep.subr.mxu0 0.0
        %1248 = vmatpush2.msra.mxu0 0.0
        %1249 = vmatprep.subr.mxu0 0.0
        %1250 = vmatpush2.msra.mxu0 0.0
        %1251 = vmatprep.subr.mxu0 0.0
        %1252 = vmatpush2.msra.mxu0 0.0
        %1253 = vmatprep.subr.mxu0 0.0
        %1254 = vmatpush2.msra.mxu0 0.0
        %1255 = vmatprep.subr.mxu0 0.0
        %1256 = vmatpush2.msra.mxu0 0.0
        %1257 = vmatprep.mubr.f32.mxu0 0.0
        %v1258 = vand.u32 %v1013, 4294901760
        %v1259 = vsub.f32 %v1013, %v1258
        %1260 = vmatmul.mubr.f32.gmra.mxu0 %v1259
        %v1261 = vpop.f32.mrf.mxu0
        %v1262 = vadd.f32 %v1182, %v1261
        %v1263 = vpop.f32.mrf.mxu0
        %1264 = vdwg.mxu0
        %1265 = vmatprep.subr.mxu0 0.0
        %1266 = vmatpush1.msra.mxu0 0.0
        %1267 = vmatprep.subr.mxu0 0.0
        %1268 = vmatpush1.msra.mxu0 0.0
        %1269 = vmatprep.subr.mxu0 0.0
        %1270 = vmatpush1.msra.mxu0 0.0
        %1271 = vmatprep.subr.mxu0 0.0
        %1272 = vmatpush1.msra.mxu0 0.0
        %1273 = vmatprep.subr.mxu0 0.0
        %1274 = vmatpush1.msra.mxu0 0.0
        %1275 = vmatprep.subr.mxu0 0.0
        %1276 = vmatpush1.msra.mxu0 0.0
        %1277 = vmatprep.subr.mxu0 0.0
        %1278 = vmatpush1.msra.mxu0 0.0
        %1279 = vmatprep.subr.mxu0 0.0
        %1280 = vmatpush1.msra.mxu0 0.0
        %1281 = vmatprep.subr.mxu0 0.0
        %1282 = vmatpush1.msra.mxu0 0.0
        %1283 = vmatprep.subr.mxu0 0.0
        %1284 = vmatpush1.msra.mxu0 0.0
        %1285 = vmatprep.subr.mxu0 0.0
        %1286 = vmatpush1.msra.mxu0 0.0
        %1287 = vmatprep.subr.mxu0 0.0
        %1288 = vmatpush1.msra.mxu0 0.0
        %1289 = vmatprep.subr.mxu0 0.0
        %v1290 = vand.u32 %v1010, 4294901760
        %1291 = vmatpush1.msra.mxu0 %v1290
        %1292 = vmatprep.subr.mxu0 0.0
        %v1293 = vand.u32 %v1009, 4294901760
        %1294 = vmatpush1.msra.mxu0 %v1293
        %1295 = vmatprep.subr.mxu0 0.0
        %v1296 = vand.u32 %v1008, 4294901760
        %1297 = vmatpush1.msra.mxu0 %v1296
        %1298 = vmatprep.subr.mxu0 0.0
        %v1299 = vand.u32 %v1007, 4294901760
        %1300 = vmatpush1.msra.mxu0 %v1299
        %1301 = vmatprep.subr.mxu0 0.0
        %1302 = vmatpush2.msra.mxu0 0.0
        %1303 = vmatprep.subr.mxu0 0.0
        %1304 = vmatpush2.msra.mxu0 0.0
        %1305 = vmatprep.subr.mxu0 0.0
        %1306 = vmatpush2.msra.mxu0 0.0
        %1307 = vmatprep.subr.mxu0 0.0
        %1308 = vmatpush2.msra.mxu0 0.0
        %1309 = vmatprep.subr.mxu0 0.0
        %1310 = vmatpush2.msra.mxu0 0.0
        %1311 = vmatprep.subr.mxu0 0.0
        %1312 = vmatpush2.msra.mxu0 0.0
        %1313 = vmatprep.subr.mxu0 0.0
        %1314 = vmatpush2.msra.mxu0 0.0
        %1315 = vmatprep.subr.mxu0 0.0
        %1316 = vmatpush2.msra.mxu0 0.0
        %1317 = vmatprep.subr.mxu0 0.0
        %1318 = vmatpush2.msra.mxu0 0.0
        %1319 = vmatprep.subr.mxu0 0.0
        %1320 = vmatpush2.msra.mxu0 0.0
        %1321 = vmatprep.subr.mxu0 0.0
        %1322 = vmatpush2.msra.mxu0 0.0
        %1323 = vmatprep.subr.mxu0 0.0
        %1324 = vmatpush2.msra.mxu0 0.0
        %1325 = vmatprep.subr.mxu0 0.0
        %1326 = vmatpush2.msra.mxu0 0.0
        %1327 = vmatprep.subr.mxu0 0.0
        %1328 = vmatpush2.msra.mxu0 0.0
        %1329 = vmatprep.subr.mxu0 0.0
        %1330 = vmatpush2.msra.mxu0 0.0
        %1331 = vmatprep.subr.mxu0 0.0
        %1332 = vmatpush2.msra.mxu0 0.0
        %1333 = vmatprep.mubr.f32.mxu0 0.0
        %v1334 = vand.u32 %v1013, 4294901760
        %v1335 = vsub.f32 %v1013, %v1334
        %v1336 = vand.u32 %v1335, 4294901760
        %1337 = vmatmul.mubr.f32.gmra.mxu0 %v1336
        %v1338 = vpop.f32.mrf.mxu0
        %v1339 = vadd.f32 %v1262, %v1338
        %v1340 = vpop.f32.mrf.mxu0
        %1341 = vdwg.mxu0
        %1342 = vmatprep.subr.mxu0 0.0
        %1343 = vmatpush1.msra.mxu0 0.0
        %1344 = vmatprep.subr.mxu0 0.0
        %1345 = vmatpush1.msra.mxu0 0.0
        %1346 = vmatprep.subr.mxu0 0.0
        %1347 = vmatpush1.msra.mxu0 0.0
        %1348 = vmatprep.subr.mxu0 0.0
        %1349 = vmatpush1.msra.mxu0 0.0
        %1350 = vmatprep.subr.mxu0 0.0
        %1351 = vmatpush1.msra.mxu0 0.0
        %1352 = vmatprep.subr.mxu0 0.0
        %1353 = vmatpush1.msra.mxu0 0.0
        %1354 = vmatprep.subr.mxu0 0.0
        %1355 = vmatpush1.msra.mxu0 0.0
        %1356 = vmatprep.subr.mxu0 0.0
        %1357 = vmatpush1.msra.mxu0 0.0
        %1358 = vmatprep.subr.mxu0 0.0
        %1359 = vmatpush1.msra.mxu0 0.0
        %1360 = vmatprep.subr.mxu0 0.0
        %1361 = vmatpush1.msra.mxu0 0.0
        %1362 = vmatprep.subr.mxu0 0.0
        %1363 = vmatpush1.msra.mxu0 0.0
        %1364 = vmatprep.subr.mxu0 0.0
        %1365 = vmatpush1.msra.mxu0 0.0
        %1366 = vmatprep.subr.mxu0 0.0
        %v1367 = vand.u32 %v1010, 4294901760
        %v1368 = vsub.f32 %v1010, %v1367
        %v1369 = vand.u32 %v1368, 4294901760
        %1370 = vmatpush1.msra.mxu0 %v1369
        %1371 = vmatprep.subr.mxu0 0.0
        %v1372 = vand.u32 %v1009, 4294901760
        %v1373 = vsub.f32 %v1009, %v1372
        %v1374 = vand.u32 %v1373, 4294901760
        %1375 = vmatpush1.msra.mxu0 %v1374
        %1376 = vmatprep.subr.mxu0 0.0
        %v1377 = vand.u32 %v1008, 4294901760
        %v1378 = vsub.f32 %v1008, %v1377
        %v1379 = vand.u32 %v1378, 4294901760
        %1380 = vmatpush1.msra.mxu0 %v1379
        %1381 = vmatprep.subr.mxu0 0.0
        %v1382 = vand.u32 %v1007, 4294901760
        %v1383 = vsub.f32 %v1007, %v1382
        %v1384 = vand.u32 %v1383, 4294901760
        %1385 = vmatpush1.msra.mxu0 %v1384
        %1386 = vmatprep.subr.mxu0 0.0
        %1387 = vmatpush2.msra.mxu0 0.0
        %1388 = vmatprep.subr.mxu0 0.0
        %1389 = vmatpush2.msra.mxu0 0.0
        %1390 = vmatprep.subr.mxu0 0.0
        %1391 = vmatpush2.msra.mxu0 0.0
        %1392 = vmatprep.subr.mxu0 0.0
        %1393 = vmatpush2.msra.mxu0 0.0
        %1394 = vmatprep.subr.mxu0 0.0
        %1395 = vmatpush2.msra.mxu0 0.0
        %1396 = vmatprep.subr.mxu0 0.0
        %1397 = vmatpush2.msra.mxu0 0.0
        %1398 = vmatprep.subr.mxu0 0.0
        %1399 = vmatpush2.msra.mxu0 0.0
        %1400 = vmatprep.subr.mxu0 0.0
        %1401 = vmatpush2.msra.mxu0 0.0
        %1402 = vmatprep.subr.mxu0 0.0
        %1403 = vmatpush2.msra.mxu0 0.0
        %1404 = vmatprep.subr.mxu0 0.0
        %1405 = vmatpush2.msra.mxu0 0.0
        %1406 = vmatprep.subr.mxu0 0.0
        %1407 = vmatpush2.msra.mxu0 0.0
        %1408 = vmatprep.subr.mxu0 0.0
        %1409 = vmatpush2.msra.mxu0 0.0
        %1410 = vmatprep.subr.mxu0 0.0
        %1411 = vmatpush2.msra.mxu0 0.0
        %1412 = vmatprep.subr.mxu0 0.0
        %1413 = vmatpush2.msra.mxu0 0.0
        %1414 = vmatprep.subr.mxu0 0.0
        %1415 = vmatpush2.msra.mxu0 0.0
        %1416 = vmatprep.subr.mxu0 0.0
        %1417 = vmatpush2.msra.mxu0 0.0
        %1418 = vmatprep.mubr.f32.mxu0 0.0
        %v1419 = vand.u32 %v1013, 4294901760
        %1420 = vmatmul.mubr.f32.gmra.mxu0 %v1419
        %v1421 = vpop.f32.mrf.mxu0
        %v1422 = vadd.f32 %v1339, %v1421
        %v1423 = vpop.f32.mrf.mxu0
        %1424 = vdwg.mxu0
        %1425 = vmatprep.subr.mxu0 0.0
        %1426 = vmatpush1.msra.mxu0 0.0
        %1427 = vmatprep.subr.mxu0 0.0
        %1428 = vmatpush1.msra.mxu0 0.0
        %1429 = vmatprep.subr.mxu0 0.0
        %1430 = vmatpush1.msra.mxu0 0.0
        %1431 = vmatprep.subr.mxu0 0.0
        %1432 = vmatpush1.msra.mxu0 0.0
        %1433 = vmatprep.subr.mxu0 0.0
        %1434 = vmatpush1.msra.mxu0 0.0
        %1435 = vmatprep.subr.mxu0 0.0
        %1436 = vmatpush1.msra.mxu0 0.0
        %1437 = vmatprep.subr.mxu0 0.0
        %1438 = vmatpush1.msra.mxu0 0.0
        %1439 = vmatprep.subr.mxu0 0.0
        %1440 = vmatpush1.msra.mxu0 0.0
        %1441 = vmatprep.subr.mxu0 0.0
        %1442 = vmatpush1.msra.mxu0 0.0
        %1443 = vmatprep.subr.mxu0 0.0
        %1444 = vmatpush1.msra.mxu0 0.0
        %1445 = vmatprep.subr.mxu0 0.0
        %1446 = vmatpush1.msra.mxu0 0.0
        %1447 = vmatprep.subr.mxu0 0.0
        %1448 = vmatpush1.msra.mxu0 0.0
        %1449 = vmatprep.subr.mxu0 0.0
        %v1450 = vand.u32 %v1010, 4294901760
        %1451 = vmatpush1.msra.mxu0 %v1450
        %1452 = vmatprep.subr.mxu0 0.0
        %v1453 = vand.u32 %v1009, 4294901760
        %1454 = vmatpush1.msra.mxu0 %v1453
        %1455 = vmatprep.subr.mxu0 0.0
        %v1456 = vand.u32 %v1008, 4294901760
        %1457 = vmatpush1.msra.mxu0 %v1456
        %1458 = vmatprep.subr.mxu0 0.0
        %v1459 = vand.u32 %v1007, 4294901760
        %1460 = vmatpush1.msra.mxu0 %v1459
        %1461 = vmatprep.subr.mxu0 0.0
        %1462 = vmatpush2.msra.mxu0 0.0
        %1463 = vmatprep.subr.mxu0 0.0
        %1464 = vmatpush2.msra.mxu0 0.0
        %1465 = vmatprep.subr.mxu0 0.0
        %1466 = vmatpush2.msra.mxu0 0.0
        %1467 = vmatprep.subr.mxu0 0.0
        %1468 = vmatpush2.msra.mxu0 0.0
        %1469 = vmatprep.subr.mxu0 0.0
        %1470 = vmatpush2.msra.mxu0 0.0
        %1471 = vmatprep.subr.mxu0 0.0
        %1472 = vmatpush2.msra.mxu0 0.0
        %1473 = vmatprep.subr.mxu0 0.0
        %1474 = vmatpush2.msra.mxu0 0.0
        %1475 = vmatprep.subr.mxu0 0.0
        %1476 = vmatpush2.msra.mxu0 0.0
        %1477 = vmatprep.subr.mxu0 0.0
        %1478 = vmatpush2.msra.mxu0 0.0
        %1479 = vmatprep.subr.mxu0 0.0
        %1480 = vmatpush2.msra.mxu0 0.0
        %1481 = vmatprep.subr.mxu0 0.0
        %1482 = vmatpush2.msra.mxu0 0.0
        %1483 = vmatprep.subr.mxu0 0.0
        %1484 = vmatpush2.msra.mxu0 0.0
        %1485 = vmatprep.subr.mxu0 0.0
        %1486 = vmatpush2.msra.mxu0 0.0
        %1487 = vmatprep.subr.mxu0 0.0
        %1488 = vmatpush2.msra.mxu0 0.0
        %1489 = vmatprep.subr.mxu0 0.0
        %1490 = vmatpush2.msra.mxu0 0.0
        %1491 = vmatprep.subr.mxu0 0.0
        %1492 = vmatpush2.msra.mxu0 0.0
        %1493 = vmatprep.mubr.f32.mxu0 0.0
        %v1494 = vand.u32 %v1013, 4294901760
        %1495 = vmatmul.mubr.f32.gmra.mxu0 %v1494
        %v1496 = vpop.f32.mrf.mxu0
        %v1497 = vadd.f32 %v1422, %v1496
        %v1498 = vpop.f32.mrf.mxu0
        %1499 = vdwg.mxu0
        %v1500 = vlaneseq
        %v1501 = vshrl.u32 %v1500, 7
        %v1502 = vsub.s32 0, %v1501
        %v1503 = vrot.slane %v1497, %v1502
        %v1504 = vsub.f32 %v279, %v1503
        %v1505 = vsub.f32 %v280, %v1503
        %v1506 = vsub.f32 %v281, %v1503
        %v1507 = vsub.f32 %v282, %v1503
        %v1508 = vsub.f32 %v283, %v1503
        %v1509 = vsub.f32 %v284, %v1503
        %v1510 = vsub.f32 %v285, %v1503
        %v1511 = vsub.f32 %v286, %v1503
        %v1512 = vsub.f32 %v287, %v1503
        %v1513 = vsub.f32 %v288, %v1503
        %v1514 = vsub.f32 %v289, %v1503
        %v1515 = vsub.f32 %v290, %v1503
        %v1516 = vsub.f32 %v291, %v1503
        %v1517 = vsub.f32 %v292, %v1503
        %v1518 = vsub.f32 %v293, %v1503
        %v1519 = vsub.f32 %v294, %v1503
        %v1520 = vsub.f32 %v295, %v1503
        %v1521 = vsub.f32 %v296, %v1503
        %v1522 = vsub.f32 %v297, %v1503
        %v1523 = vsub.f32 %v298, %v1503
        %v1524 = vsub.f32 %v299, %v1503
        %v1525 = vsub.f32 %v300, %v1503
        %v1526 = vsub.f32 %v301, %v1503
        %v1527 = vsub.f32 %v302, %v1503
        %v1528 = vsub.f32 %v303, %v1503
        %v1529 = vsub.f32 %v304, %v1503
        %v1530 = vsub.f32 %v305, %v1503
        %v1531 = vsub.f32 %v306, %v1503
        %v1532 = vsub.f32 %v307, %v1503
        %v1533 = vsub.f32 %v308, %v1503
        %v1534 = vsub.f32 %v309, %v1503
        %v1535 = vsub.f32 %v310, %v1503
        %v1536 = vmul.f32 %v1504, %v1504
        %v1537 = vmul.f32 %v1505, %v1505
        %v1538 = vmul.f32 %v1506, %v1506
        %v1539 = vmul.f32 %v1507, %v1507
        %v1540 = vmul.f32 %v1508, %v1508
        %v1541 = vmul.f32 %v1509, %v1509
        %v1542 = vmul.f32 %v1510, %v1510
        %v1543 = vmul.f32 %v1511, %v1511
        %v1544 = vmul.f32 %v1512, %v1512
        %v1545 = vmul.f32 %v1513, %v1513
        %v1546 = vmul.f32 %v1514, %v1514
        %v1547 = vmul.f32 %v1515, %v1515
        %v1548 = vmul.f32 %v1516, %v1516
        %v1549 = vmul.f32 %v1517, %v1517
        %v1550 = vmul.f32 %v1518, %v1518
        %v1551 = vmul.f32 %v1519, %v1519
        %v1552 = vmul.f32 %v1520, %v1520
        %v1553 = vmul.f32 %v1521, %v1521
        %v1554 = vmul.f32 %v1522, %v1522
        %v1555 = vmul.f32 %v1523, %v1523
        %v1556 = vmul.f32 %v1524, %v1524
        %v1557 = vmul.f32 %v1525, %v1525
        %v1558 = vmul.f32 %v1526, %v1526
        %v1559 = vmul.f32 %v1527, %v1527
        %v1560 = vmul.f32 %v1528, %v1528
        %v1561 = vmul.f32 %v1529, %v1529
        %v1562 = vmul.f32 %v1530, %v1530
        %v1563 = vmul.f32 %v1531, %v1531
        %v1564 = vmul.f32 %v1532, %v1532
        %v1565 = vmul.f32 %v1533, %v1533
        %v1566 = vmul.f32 %v1534, %v1534
        %v1567 = vmul.f32 %v1535, %v1535
        %v1568 = vadd.f32 %v1536, %v1537
        %v1569 = vadd.f32 %v1568, %v1538
        %v1570 = vadd.f32 %v1569, %v1539
        %v1571 = vadd.f32 %v1570, %v1540
        %v1572 = vadd.f32 %v1571, %v1541
        %v1573 = vadd.f32 %v1572, %v1542
        %v1574 = vadd.f32 %v1573, %v1543
        %v1575 = vadd.f32 %v1574, %v1544
        %v1576 = vadd.f32 %v1575, %v1545
        %v1577 = vadd.f32 %v1576, %v1546
        %v1578 = vadd.f32 %v1577, %v1547
        %v1579 = vadd.f32 %v1578, %v1548
        %v1580 = vadd.f32 %v1579, %v1549
        %v1581 = vadd.f32 %v1580, %v1550
        %v1582 = vadd.f32 %v1581, %v1551
        %v1583 = vadd.f32 %v1582, %v1552
        %v1584 = vadd.f32 %v1583, %v1553
        %v1585 = vadd.f32 %v1584, %v1554
        %v1586 = vadd.f32 %v1585, %v1555
        %v1587 = vadd.f32 %v1586, %v1556
        %v1588 = vadd.f32 %v1587, %v1557
        %v1589 = vadd.f32 %v1588, %v1558
        %v1590 = vadd.f32 %v1589, %v1559
        %v1591 = vadd.f32 %v1590, %v1560
        %v1592 = vadd.f32 %v1591, %v1561
        %v1593 = vadd.f32 %v1592, %v1562
        %v1594 = vadd.f32 %v1593, %v1563
        %v1595 = vadd.f32 %v1594, %v1564
        %v1596 = vadd.f32 %v1595, %v1565
        %v1597 = vadd.f32 %v1596, %v1566
        %v1598 = vadd.f32 %v1597, %v1567
        %v1599 = vrot.slane %v1598, 4
        %v1600 = vadd.f32 %v1598, %v1599
        %v1601 = vrot.slane %v1600, 2
        %v1602 = vadd.f32 %v1600, %v1601
        %v1603 = vrot.slane %v1602, 1
        %v1604 = vadd.f32 %v1602, %v1603
        %1605 = vmatprep.subr.mxu0 0.0
        %v1606 = vand.u32 %v363, 4294901760
        %1607 = vmatpush1.msra.mxu0 %v1606
        %1608 = vmatprep.subr.mxu0 0.0
        %v1609 = vand.u32 %v362, 4294901760
        %1610 = vmatpush1.msra.mxu0 %v1609
        %1611 = vmatprep.subr.mxu0 0.0
        %v1612 = vand.u32 %v361, 4294901760
        %1613 = vmatpush1.msra.mxu0 %v1612
        %1614 = vmatprep.subr.mxu0 0.0
        %v1615 = vand.u32 %v360, 4294901760
        %1616 = vmatpush1.msra.mxu0 %v1615
        %1617 = vmatprep.subr.mxu0 0.0
        %v1618 = vand.u32 %v359, 4294901760
        %1619 = vmatpush1.msra.mxu0 %v1618
        %1620 = vmatprep.subr.mxu0 0.0
        %v1621 = vand.u32 %v358, 4294901760
        %1622 = vmatpush1.msra.mxu0 %v1621
        %1623 = vmatprep.subr.mxu0 0.0
        %v1624 = vand.u32 %v357, 4294901760
        %1625 = vmatpush1.msra.mxu0 %v1624
        %1626 = vmatprep.subr.mxu0 0.0
        %v1627 = vand.u32 %v356, 4294901760
        %1628 = vmatpush1.msra.mxu0 %v1627
        %1629 = vmatprep.subr.mxu0 0.0
        %v1630 = vand.u32 %v355, 4294901760
        %1631 = vmatpush1.msra.mxu0 %v1630
        %1632 = vmatprep.subr.mxu0 0.0
        %v1633 = vand.u32 %v354, 4294901760
        %1634 = vmatpush1.msra.mxu0 %v1633
        %1635 = vmatprep.subr.mxu0 0.0
        %v1636 = vand.u32 %v353, 4294901760
        %1637 = vmatpush1.msra.mxu0 %v1636
        %1638 = vmatprep.subr.mxu0 0.0
        %v1639 = vand.u32 %v352, 4294901760
        %1640 = vmatpush1.msra.mxu0 %v1639
        %1641 = vmatprep.subr.mxu0 0.0
        %v1642 = vand.u32 %v351, 4294901760
        %1643 = vmatpush1.msra.mxu0 %v1642
        %1644 = vmatprep.subr.mxu0 0.0
        %v1645 = vand.u32 %v350, 4294901760
        %1646 = vmatpush1.msra.mxu0 %v1645
        %1647 = vmatprep.subr.mxu0 0.0
        %v1648 = vand.u32 %v349, 4294901760
        %1649 = vmatpush1.msra.mxu0 %v1648
        %1650 = vmatprep.subr.mxu0 0.0
        %v1651 = vand.u32 %v348, 4294901760
        %1652 = vmatpush1.msra.mxu0 %v1651
        %1653 = vmatprep.subr.mxu0 0.0
        %1654 = vmatpush2.msra.mxu0 0.0
        %1655 = vmatprep.subr.mxu0 0.0
        %1656 = vmatpush2.msra.mxu0 0.0
        %1657 = vmatprep.subr.mxu0 0.0
        %1658 = vmatpush2.msra.mxu0 0.0
        %1659 = vmatprep.subr.mxu0 0.0
        %1660 = vmatpush2.msra.mxu0 0.0
        %1661 = vmatprep.subr.mxu0 0.0
        %1662 = vmatpush2.msra.mxu0 0.0
        %1663 = vmatprep.subr.mxu0 0.0
        %1664 = vmatpush2.msra.mxu0 0.0
        %1665 = vmatprep.subr.mxu0 0.0
        %1666 = vmatpush2.msra.mxu0 0.0
        %1667 = vmatprep.subr.mxu0 0.0
        %1668 = vmatpush2.msra.mxu0 0.0
        %1669 = vmatprep.subr.mxu0 0.0
        %1670 = vmatpush2.msra.mxu0 0.0
        %1671 = vmatprep.subr.mxu0 0.0
        %1672 = vmatpush2.msra.mxu0 0.0
        %1673 = vmatprep.subr.mxu0 0.0
        %1674 = vmatpush2.msra.mxu0 0.0
        %1675 = vmatprep.subr.mxu0 0.0
        %1676 = vmatpush2.msra.mxu0 0.0
        %1677 = vmatprep.subr.mxu0 0.0
        %1678 = vmatpush2.msra.mxu0 0.0
        %1679 = vmatprep.subr.mxu0 0.0
        %1680 = vmatpush2.msra.mxu0 0.0
        %1681 = vmatprep.subr.mxu0 0.0
        %1682 = vmatpush2.msra.mxu0 0.0
        %1683 = vmatprep.subr.mxu0 0.0
        %1684 = vmatpush2.msra.mxu0 0.0
        %1685 = vmatprep.mubr.f32.mxu0 0.0
        %v1686 = vand.u32 %v1604, 4294901760
        %v1687 = vsub.f32 %v1604, %v1686
        %v1688 = vand.u32 %v1687, 4294901760
        %v1689 = vsub.f32 %v1687, %v1688
        %v1690 = vand.u32 %v1689, 4294901760
        %1691 = vmatmul.mubr.f32.gmra.mxu0 %v1690
        %v1692 = vpop.f32.mrf.mxu0
        %v1693 = vadd.f32 0.0, %v1692
        %v1694 = vpop.f32.mrf.mxu0
        %1695 = vdwg.mxu0
        %1696 = vmatprep.subr.mxu0 0.0
        %v1697 = vand.u32 %v363, 4294901760
        %v1698 = vsub.f32 %v363, %v1697
        %v1699 = vand.u32 %v1698, 4294901760
        %v1700 = vsub.f32 %v1698, %v1699
        %v1701 = vand.u32 %v1700, 4294901760
        %1702 = vmatpush1.msra.mxu0 %v1701
        %1703 = vmatprep.subr.mxu0 0.0
        %v1704 = vand.u32 %v362, 4294901760
        %v1705 = vsub.f32 %v362, %v1704
        %v1706 = vand.u32 %v1705, 4294901760
        %v1707 = vsub.f32 %v1705, %v1706
        %v1708 = vand.u32 %v1707, 4294901760
        %1709 = vmatpush1.msra.mxu0 %v1708
        %1710 = vmatprep.subr.mxu0 0.0
        %v1711 = vand.u32 %v361, 4294901760
        %v1712 = vsub.f32 %v361, %v1711
        %v1713 = vand.u32 %v1712, 4294901760
        %v1714 = vsub.f32 %v1712, %v1713
        %v1715 = vand.u32 %v1714, 4294901760
        %1716 = vmatpush1.msra.mxu0 %v1715
        %1717 = vmatprep.subr.mxu0 0.0
        %v1718 = vand.u32 %v360, 4294901760
        %v1719 = vsub.f32 %v360, %v1718
        %v1720 = vand.u32 %v1719, 4294901760
        %v1721 = vsub.f32 %v1719, %v1720
        %v1722 = vand.u32 %v1721, 4294901760
        %1723 = vmatpush1.msra.mxu0 %v1722
        %1724 = vmatprep.subr.mxu0 0.0
        %v1725 = vand.u32 %v359, 4294901760
        %v1726 = vsub.f32 %v359, %v1725
        %v1727 = vand.u32 %v1726, 4294901760
        %v1728 = vsub.f32 %v1726, %v1727
        %v1729 = vand.u32 %v1728, 4294901760
        %1730 = vmatpush1.msra.mxu0 %v1729
        %1731 = vmatprep.subr.mxu0 0.0
        %v1732 = vand.u32 %v358, 4294901760
        %v1733 = vsub.f32 %v358, %v1732
        %v1734 = vand.u32 %v1733, 4294901760
        %v1735 = vsub.f32 %v1733, %v1734
        %v1736 = vand.u32 %v1735, 4294901760
        %1737 = vmatpush1.msra.mxu0 %v1736
        %1738 = vmatprep.subr.mxu0 0.0
        %v1739 = vand.u32 %v357, 4294901760
        %v1740 = vsub.f32 %v357, %v1739
        %v1741 = vand.u32 %v1740, 4294901760
        %v1742 = vsub.f32 %v1740, %v1741
        %v1743 = vand.u32 %v1742, 4294901760
        %1744 = vmatpush1.msra.mxu0 %v1743
        %1745 = vmatprep.subr.mxu0 0.0
        %v1746 = vand.u32 %v356, 4294901760
        %v1747 = vsub.f32 %v356, %v1746
        %v1748 = vand.u32 %v1747, 4294901760
        %v1749 = vsub.f32 %v1747, %v1748
        %v1750 = vand.u32 %v1749, 4294901760
        %1751 = vmatpush1.msra.mxu0 %v1750
        %1752 = vmatprep.subr.mxu0 0.0
        %v1753 = vand.u32 %v355, 4294901760
        %v1754 = vsub.f32 %v355, %v1753
        %v1755 = vand.u32 %v1754, 4294901760
        %v1756 = vsub.f32 %v1754, %v1755
        %v1757 = vand.u32 %v1756, 4294901760
        %1758 = vmatpush1.msra.mxu0 %v1757
        %1759 = vmatprep.subr.mxu0 0.0
        %v1760 = vand.u32 %v354, 4294901760
        %v1761 = vsub.f32 %v354, %v1760
        %v1762 = vand.u32 %v1761, 4294901760
        %v1763 = vsub.f32 %v1761, %v1762
        %v1764 = vand.u32 %v1763, 4294901760
        %1765 = vmatpush1.msra.mxu0 %v1764
        %1766 = vmatprep.subr.mxu0 0.0
        %v1767 = vand.u32 %v353, 4294901760
        %v1768 = vsub.f32 %v353, %v1767
        %v1769 = vand.u32 %v1768, 4294901760
        %v1770 = vsub.f32 %v1768, %v1769
        %v1771 = vand.u32 %v1770, 4294901760
        %1772 = vmatpush1.msra.mxu0 %v1771
        %1773 = vmatprep.subr.mxu0 0.0
        %v1774 = vand.u32 %v352, 4294901760
        %v1775 = vsub.f32 %v352, %v1774
        %v1776 = vand.u32 %v1775, 4294901760
        %v1777 = vsub.f32 %v1775, %v1776
        %v1778 = vand.u32 %v1777, 4294901760
        %1779 = vmatpush1.msra.mxu0 %v1778
        %1780 = vmatprep.subr.mxu0 0.0
        %v1781 = vand.u32 %v351, 4294901760
        %v1782 = vsub.f32 %v351, %v1781
        %v1783 = vand.u32 %v1782, 4294901760
        %v1784 = vsub.f32 %v1782, %v1783
        %v1785 = vand.u32 %v1784, 4294901760
        %1786 = vmatpush1.msra.mxu0 %v1785
        %1787 = vmatprep.subr.mxu0 0.0
        %v1788 = vand.u32 %v350, 4294901760
        %v1789 = vsub.f32 %v350, %v1788
        %v1790 = vand.u32 %v1789, 4294901760
        %v1791 = vsub.f32 %v1789, %v1790
        %v1792 = vand.u32 %v1791, 4294901760
        %1793 = vmatpush1.msra.mxu0 %v1792
        %1794 = vmatprep.subr.mxu0 0.0
        %v1795 = vand.u32 %v349, 4294901760
        %v1796 = vsub.f32 %v349, %v1795
        %v1797 = vand.u32 %v1796, 4294901760
        %v1798 = vsub.f32 %v1796, %v1797
        %v1799 = vand.u32 %v1798, 4294901760
        %1800 = vmatpush1.msra.mxu0 %v1799
        %1801 = vmatprep.subr.mxu0 0.0
        %v1802 = vand.u32 %v348, 4294901760
        %v1803 = vsub.f32 %v348, %v1802
        %v1804 = vand.u32 %v1803, 4294901760
        %v1805 = vsub.f32 %v1803, %v1804
        %v1806 = vand.u32 %v1805, 4294901760
        %1807 = vmatpush1.msra.mxu0 %v1806
        %1808 = vmatprep.subr.mxu0 0.0
        %1809 = vmatpush2.msra.mxu0 0.0
        %1810 = vmatprep.subr.mxu0 0.0
        %1811 = vmatpush2.msra.mxu0 0.0
        %1812 = vmatprep.subr.mxu0 0.0
        %1813 = vmatpush2.msra.mxu0 0.0
        %1814 = vmatprep.subr.mxu0 0.0
        %1815 = vmatpush2.msra.mxu0 0.0
        %1816 = vmatprep.subr.mxu0 0.0
        %1817 = vmatpush2.msra.mxu0 0.0
        %1818 = vmatprep.subr.mxu0 0.0
        %1819 = vmatpush2.msra.mxu0 0.0
        %1820 = vmatprep.subr.mxu0 0.0
        %1821 = vmatpush2.msra.mxu0 0.0
        %1822 = vmatprep.subr.mxu0 0.0
        %1823 = vmatpush2.msra.mxu0 0.0
        %1824 = vmatprep.subr.mxu0 0.0
        %1825 = vmatpush2.msra.mxu0 0.0
        %1826 = vmatprep.subr.mxu0 0.0
        %1827 = vmatpush2.msra.mxu0 0.0
        %1828 = vmatprep.subr.mxu0 0.0
        %1829 = vmatpush2.msra.mxu0 0.0
        %1830 = vmatprep.subr.mxu0 0.0
        %1831 = vmatpush2.msra.mxu0 0.0
        %1832 = vmatprep.subr.mxu0 0.0
        %1833 = vmatpush2.msra.mxu0 0.0
        %1834 = vmatprep.subr.mxu0 0.0
        %1835 = vmatpush2.msra.mxu0 0.0
        %1836 = vmatprep.subr.mxu0 0.0
        %1837 = vmatpush2.msra.mxu0 0.0
        %1838 = vmatprep.subr.mxu0 0.0
        %1839 = vmatpush2.msra.mxu0 0.0
        %1840 = vmatprep.mubr.f32.mxu0 0.0
        %v1841 = vand.u32 %v1604, 4294901760
        %1842 = vmatmul.mubr.f32.gmra.mxu0 %v1841
        %v1843 = vpop.f32.mrf.mxu0
        %v1844 = vadd.f32 %v1693, %v1843
        %v1845 = vpop.f32.mrf.mxu0
        %1846 = vdwg.mxu0
        %1847 = vmatprep.subr.mxu0 0.0
        %v1848 = vand.u32 %v363, 4294901760
        %v1849 = vsub.f32 %v363, %v1848
        %1850 = vmatpush1.msra.mxu0 %v1849
        %1851 = vmatprep.subr.mxu0 0.0
        %v1852 = vand.u32 %v362, 4294901760
        %v1853 = vsub.f32 %v362, %v1852
        %1854 = vmatpush1.msra.mxu0 %v1853
        %1855 = vmatprep.subr.mxu0 0.0
        %v1856 = vand.u32 %v361, 4294901760
        %v1857 = vsub.f32 %v361, %v1856
        %1858 = vmatpush1.msra.mxu0 %v1857
        %1859 = vmatprep.subr.mxu0 0.0
        %v1860 = vand.u32 %v360, 4294901760
        %v1861 = vsub.f32 %v360, %v1860
        %1862 = vmatpush1.msra.mxu0 %v1861
        %1863 = vmatprep.subr.mxu0 0.0
        %v1864 = vand.u32 %v359, 4294901760
        %v1865 = vsub.f32 %v359, %v1864
        %1866 = vmatpush1.msra.mxu0 %v1865
        %1867 = vmatprep.subr.mxu0 0.0
        %v1868 = vand.u32 %v358, 4294901760
        %v1869 = vsub.f32 %v358, %v1868
        %1870 = vmatpush1.msra.mxu0 %v1869
        %1871 = vmatprep.subr.mxu0 0.0
        %v1872 = vand.u32 %v357, 4294901760
        %v1873 = vsub.f32 %v357, %v1872
        %1874 = vmatpush1.msra.mxu0 %v1873
        %1875 = vmatprep.subr.mxu0 0.0
        %v1876 = vand.u32 %v356, 4294901760
        %v1877 = vsub.f32 %v356, %v1876
        %1878 = vmatpush1.msra.mxu0 %v1877
        %1879 = vmatprep.subr.mxu0 0.0
        %v1880 = vand.u32 %v355, 4294901760
        %v1881 = vsub.f32 %v355, %v1880
        %1882 = vmatpush1.msra.mxu0 %v1881
        %1883 = vmatprep.subr.mxu0 0.0
        %v1884 = vand.u32 %v354, 4294901760
        %v1885 = vsub.f32 %v354, %v1884
        %1886 = vmatpush1.msra.mxu0 %v1885
        %1887 = vmatprep.subr.mxu0 0.0
        %v1888 = vand.u32 %v353, 4294901760
        %v1889 = vsub.f32 %v353, %v1888
        %1890 = vmatpush1.msra.mxu0 %v1889
        %1891 = vmatprep.subr.mxu0 0.0
        %v1892 = vand.u32 %v352, 4294901760
        %v1893 = vsub.f32 %v352, %v1892
        %1894 = vmatpush1.msra.mxu0 %v1893
        %1895 = vmatprep.subr.mxu0 0.0
        %v1896 = vand.u32 %v351, 4294901760
        %v1897 = vsub.f32 %v351, %v1896
        %1898 = vmatpush1.msra.mxu0 %v1897
        %1899 = vmatprep.subr.mxu0 0.0
        %v1900 = vand.u32 %v350, 4294901760
        %v1901 = vsub.f32 %v350, %v1900
        %1902 = vmatpush1.msra.mxu0 %v1901
        %1903 = vmatprep.subr.mxu0 0.0
        %v1904 = vand.u32 %v349, 4294901760
        %v1905 = vsub.f32 %v349, %v1904
        %1906 = vmatpush1.msra.mxu0 %v1905
        %1907 = vmatprep.subr.mxu0 0.0
        %v1908 = vand.u32 %v348, 4294901760
        %v1909 = vsub.f32 %v348, %v1908
        %1910 = vmatpush1.msra.mxu0 %v1909
        %1911 = vmatprep.subr.mxu0 0.0
        %1912 = vmatpush2.msra.mxu0 0.0
        %1913 = vmatprep.subr.mxu0 0.0
        %1914 = vmatpush2.msra.mxu0 0.0
        %1915 = vmatprep.subr.mxu0 0.0
        %1916 = vmatpush2.msra.mxu0 0.0
        %1917 = vmatprep.subr.mxu0 0.0
        %1918 = vmatpush2.msra.mxu0 0.0
        %1919 = vmatprep.subr.mxu0 0.0
        %1920 = vmatpush2.msra.mxu0 0.0
        %1921 = vmatprep.subr.mxu0 0.0
        %1922 = vmatpush2.msra.mxu0 0.0
        %1923 = vmatprep.subr.mxu0 0.0
        %1924 = vmatpush2.msra.mxu0 0.0
        %1925 = vmatprep.subr.mxu0 0.0
        %1926 = vmatpush2.msra.mxu0 0.0
        %1927 = vmatprep.subr.mxu0 0.0
        %1928 = vmatpush2.msra.mxu0 0.0
        %1929 = vmatprep.subr.mxu0 0.0
        %1930 = vmatpush2.msra.mxu0 0.0
        %1931 = vmatprep.subr.mxu0 0.0
        %1932 = vmatpush2.msra.mxu0 0.0
        %1933 = vmatprep.subr.mxu0 0.0
        %1934 = vmatpush2.msra.mxu0 0.0
        %1935 = vmatprep.subr.mxu0 0.0
        %1936 = vmatpush2.msra.mxu0 0.0
        %1937 = vmatprep.subr.mxu0 0.0
        %1938 = vmatpush2.msra.mxu0 0.0
        %1939 = vmatprep.subr.mxu0 0.0
        %1940 = vmatpush2.msra.mxu0 0.0
        %1941 = vmatprep.subr.mxu0 0.0
        %1942 = vmatpush2.msra.mxu0 0.0
        %1943 = vmatprep.mubr.f32.mxu0 0.0
        %v1944 = vand.u32 %v1604, 4294901760
        %v1945 = vsub.f32 %v1604, %v1944
        %1946 = vmatmul.mubr.f32.gmra.mxu0 %v1945
        %v1947 = vpop.f32.mrf.mxu0
        %v1948 = vadd.f32 %v1844, %v1947
        %v1949 = vpop.f32.mrf.mxu0
        %1950 = vdwg.mxu0
        %1951 = vmatprep.subr.mxu0 0.0
        %v1952 = vand.u32 %v363, 4294901760
        %1953 = vmatpush1.msra.mxu0 %v1952
        %1954 = vmatprep.subr.mxu0 0.0
        %v1955 = vand.u32 %v362, 4294901760
        %1956 = vmatpush1.msra.mxu0 %v1955
        %1957 = vmatprep.subr.mxu0 0.0
        %v1958 = vand.u32 %v361, 4294901760
        %1959 = vmatpush1.msra.mxu0 %v1958
        %1960 = vmatprep.subr.mxu0 0.0
        %v1961 = vand.u32 %v360, 4294901760
        %1962 = vmatpush1.msra.mxu0 %v1961
        %1963 = vmatprep.subr.mxu0 0.0
        %v1964 = vand.u32 %v359, 4294901760
        %1965 = vmatpush1.msra.mxu0 %v1964
        %1966 = vmatprep.subr.mxu0 0.0
        %v1967 = vand.u32 %v358, 4294901760
        %1968 = vmatpush1.msra.mxu0 %v1967
        %1969 = vmatprep.subr.mxu0 0.0
        %v1970 = vand.u32 %v357, 4294901760
        %1971 = vmatpush1.msra.mxu0 %v1970
        %1972 = vmatprep.subr.mxu0 0.0
        %v1973 = vand.u32 %v356, 4294901760
        %1974 = vmatpush1.msra.mxu0 %v1973
        %1975 = vmatprep.subr.mxu0 0.0
        %v1976 = vand.u32 %v355, 4294901760
        %1977 = vmatpush1.msra.mxu0 %v1976
        %1978 = vmatprep.subr.mxu0 0.0
        %v1979 = vand.u32 %v354, 4294901760
        %1980 = vmatpush1.msra.mxu0 %v1979
        %1981 = vmatprep.subr.mxu0 0.0
        %v1982 = vand.u32 %v353, 4294901760
        %1983 = vmatpush1.msra.mxu0 %v1982
        %1984 = vmatprep.subr.mxu0 0.0
        %v1985 = vand.u32 %v352, 4294901760
        %1986 = vmatpush1.msra.mxu0 %v1985
        %1987 = vmatprep.subr.mxu0 0.0
        %v1988 = vand.u32 %v351, 4294901760
        %1989 = vmatpush1.msra.mxu0 %v1988
        %1990 = vmatprep.subr.mxu0 0.0
        %v1991 = vand.u32 %v350, 4294901760
        %1992 = vmatpush1.msra.mxu0 %v1991
        %1993 = vmatprep.subr.mxu0 0.0
        %v1994 = vand.u32 %v349, 4294901760
        %1995 = vmatpush1.msra.mxu0 %v1994
        %1996 = vmatprep.subr.mxu0 0.0
        %v1997 = vand.u32 %v348, 4294901760
        %1998 = vmatpush1.msra.mxu0 %v1997
        %1999 = vmatprep.subr.mxu0 0.0
        %2000 = vmatpush2.msra.mxu0 0.0
        %2001 = vmatprep.subr.mxu0 0.0
        %2002 = vmatpush2.msra.mxu0 0.0
        %2003 = vmatprep.subr.mxu0 0.0
        %2004 = vmatpush2.msra.mxu0 0.0
        %2005 = vmatprep.subr.mxu0 0.0
        %2006 = vmatpush2.msra.mxu0 0.0
        %2007 = vmatprep.subr.mxu0 0.0
        %2008 = vmatpush2.msra.mxu0 0.0
        %2009 = vmatprep.subr.mxu0 0.0
        %2010 = vmatpush2.msra.mxu0 0.0
        %2011 = vmatprep.subr.mxu0 0.0
        %2012 = vmatpush2.msra.mxu0 0.0
        %2013 = vmatprep.subr.mxu0 0.0
        %2014 = vmatpush2.msra.mxu0 0.0
        %2015 = vmatprep.subr.mxu0 0.0
        %2016 = vmatpush2.msra.mxu0 0.0
        %2017 = vmatprep.subr.mxu0 0.0
        %2018 = vmatpush2.msra.mxu0 0.0
        %2019 = vmatprep.subr.mxu0 0.0
        %2020 = vmatpush2.msra.mxu0 0.0
        %2021 = vmatprep.subr.mxu0 0.0
        %2022 = vmatpush2.msra.mxu0 0.0
        %2023 = vmatprep.subr.mxu0 0.0
        %2024 = vmatpush2.msra.mxu0 0.0
        %2025 = vmatprep.subr.mxu0 0.0
        %2026 = vmatpush2.msra.mxu0 0.0
        %2027 = vmatprep.subr.mxu0 0.0
        %2028 = vmatpush2.msra.mxu0 0.0
        %2029 = vmatprep.subr.mxu0 0.0
        %2030 = vmatpush2.msra.mxu0 0.0
        %2031 = vmatprep.mubr.f32.mxu0 0.0
        %v2032 = vand.u32 %v1604, 4294901760
        %v2033 = vsub.f32 %v1604, %v2032
        %v2034 = vand.u32 %v2033, 4294901760
        %2035 = vmatmul.mubr.f32.gmra.mxu0 %v2034
        %v2036 = vpop.f32.mrf.mxu0
        %v2037 = vadd.f32 %v1948, %v2036
        %v2038 = vpop.f32.mrf.mxu0
        %2039 = vdwg.mxu0
        %2040 = vmatprep.subr.mxu0 0.0
        %v2041 = vand.u32 %v363, 4294901760
        %v2042 = vsub.f32 %v363, %v2041
        %v2043 = vand.u32 %v2042, 4294901760
        %2044 = vmatpush1.msra.mxu0 %v2043
        %2045 = vmatprep.subr.mxu0 0.0
        %v2046 = vand.u32 %v362, 4294901760
        %v2047 = vsub.f32 %v362, %v2046
        %v2048 = vand.u32 %v2047, 4294901760
        %2049 = vmatpush1.msra.mxu0 %v2048
        %2050 = vmatprep.subr.mxu0 0.0
        %v2051 = vand.u32 %v361, 4294901760
        %v2052 = vsub.f32 %v361, %v2051
        %v2053 = vand.u32 %v2052, 4294901760
        %2054 = vmatpush1.msra.mxu0 %v2053
        %2055 = vmatprep.subr.mxu0 0.0
        %v2056 = vand.u32 %v360, 4294901760
        %v2057 = vsub.f32 %v360, %v2056
        %v2058 = vand.u32 %v2057, 4294901760
        %2059 = vmatpush1.msra.mxu0 %v2058
        %2060 = vmatprep.subr.mxu0 0.0
        %v2061 = vand.u32 %v359, 4294901760
        %v2062 = vsub.f32 %v359, %v2061
        %v2063 = vand.u32 %v2062, 4294901760
        %2064 = vmatpush1.msra.mxu0 %v2063
        %2065 = vmatprep.subr.mxu0 0.0
        %v2066 = vand.u32 %v358, 4294901760
        %v2067 = vsub.f32 %v358, %v2066
        %v2068 = vand.u32 %v2067, 4294901760
        %2069 = vmatpush1.msra.mxu0 %v2068
        %2070 = vmatprep.subr.mxu0 0.0
        %v2071 = vand.u32 %v357, 4294901760
        %v2072 = vsub.f32 %v357, %v2071
        %v2073 = vand.u32 %v2072, 4294901760
        %2074 = vmatpush1.msra.mxu0 %v2073
        %2075 = vmatprep.subr.mxu0 0.0
        %v2076 = vand.u32 %v356, 4294901760
        %v2077 = vsub.f32 %v356, %v2076
        %v2078 = vand.u32 %v2077, 4294901760
        %2079 = vmatpush1.msra.mxu0 %v2078
        %2080 = vmatprep.subr.mxu0 0.0
        %v2081 = vand.u32 %v355, 4294901760
        %v2082 = vsub.f32 %v355, %v2081
        %v2083 = vand.u32 %v2082, 4294901760
        %2084 = vmatpush1.msra.mxu0 %v2083
        %2085 = vmatprep.subr.mxu0 0.0
        %v2086 = vand.u32 %v354, 4294901760
        %v2087 = vsub.f32 %v354, %v2086
        %v2088 = vand.u32 %v2087, 4294901760
        %2089 = vmatpush1.msra.mxu0 %v2088
        %2090 = vmatprep.subr.mxu0 0.0
        %v2091 = vand.u32 %v353, 4294901760
        %v2092 = vsub.f32 %v353, %v2091
        %v2093 = vand.u32 %v2092, 4294901760
        %2094 = vmatpush1.msra.mxu0 %v2093
        %2095 = vmatprep.subr.mxu0 0.0
        %v2096 = vand.u32 %v352, 4294901760
        %v2097 = vsub.f32 %v352, %v2096
        %v2098 = vand.u32 %v2097, 4294901760
        %2099 = vmatpush1.msra.mxu0 %v2098
        %2100 = vmatprep.subr.mxu0 0.0
        %v2101 = vand.u32 %v351, 4294901760
        %v2102 = vsub.f32 %v351, %v2101
        %v2103 = vand.u32 %v2102, 4294901760
        %2104 = vmatpush1.msra.mxu0 %v2103
        %2105 = vmatprep.subr.mxu0 0.0
        %v2106 = vand.u32 %v350, 4294901760
        %v2107 = vsub.f32 %v350, %v2106
        %v2108 = vand.u32 %v2107, 4294901760
        %2109 = vmatpush1.msra.mxu0 %v2108
        %2110 = vmatprep.subr.mxu0 0.0
        %v2111 = vand.u32 %v349, 4294901760
        %v2112 = vsub.f32 %v349, %v2111
        %v2113 = vand.u32 %v2112, 4294901760
        %2114 = vmatpush1.msra.mxu0 %v2113
        %2115 = vmatprep.subr.mxu0 0.0
        %v2116 = vand.u32 %v348, 4294901760
        %v2117 = vsub.f32 %v348, %v2116
        %v2118 = vand.u32 %v2117, 4294901760
        %2119 = vmatpush1.msra.mxu0 %v2118
        %2120 = vmatprep.subr.mxu0 0.0
        %2121 = vmatpush2.msra.mxu0 0.0
        %2122 = vmatprep.subr.mxu0 0.0
        %2123 = vmatpush2.msra.mxu0 0.0
        %2124 = vmatprep.subr.mxu0 0.0
        %2125 = vmatpush2.msra.mxu0 0.0
        %2126 = vmatprep.subr.mxu0 0.0
        %2127 = vmatpush2.msra.mxu0 0.0
        %2128 = vmatprep.subr.mxu0 0.0
        %2129 = vmatpush2.msra.mxu0 0.0
        %2130 = vmatprep.subr.mxu0 0.0
        %2131 = vmatpush2.msra.mxu0 0.0
        %2132 = vmatprep.subr.mxu0 0.0
        %2133 = vmatpush2.msra.mxu0 0.0
        %2134 = vmatprep.subr.mxu0 0.0
        %2135 = vmatpush2.msra.mxu0 0.0
        %2136 = vmatprep.subr.mxu0 0.0
        %2137 = vmatpush2.msra.mxu0 0.0
        %2138 = vmatprep.subr.mxu0 0.0
        %2139 = vmatpush2.msra.mxu0 0.0
        %2140 = vmatprep.subr.mxu0 0.0
        %2141 = vmatpush2.msra.mxu0 0.0
        %2142 = vmatprep.subr.mxu0 0.0
        %2143 = vmatpush2.msra.mxu0 0.0
        %2144 = vmatprep.subr.mxu0 0.0
        %2145 = vmatpush2.msra.mxu0 0.0
        %2146 = vmatprep.subr.mxu0 0.0
        %2147 = vmatpush2.msra.mxu0 0.0
        %2148 = vmatprep.subr.mxu0 0.0
        %2149 = vmatpush2.msra.mxu0 0.0
        %2150 = vmatprep.subr.mxu0 0.0
        %2151 = vmatpush2.msra.mxu0 0.0
        %2152 = vmatprep.mubr.f32.mxu0 0.0
        %v2153 = vand.u32 %v1604, 4294901760
        %2154 = vmatmul.mubr.f32.gmra.mxu0 %v2153
        %v2155 = vpop.f32.mrf.mxu0
        %v2156 = vadd.f32 %v2037, %v2155
        %v2157 = vpop.f32.mrf.mxu0
        %2158 = vdwg.mxu0
        %2159 = vmatprep.subr.mxu0 0.0
        %v2160 = vand.u32 %v363, 4294901760
        %2161 = vmatpush1.msra.mxu0 %v2160
        %2162 = vmatprep.subr.mxu0 0.0
        %v2163 = vand.u32 %v362, 4294901760
        %2164 = vmatpush1.msra.mxu0 %v2163
        %2165 = vmatprep.subr.mxu0 0.0
        %v2166 = vand.u32 %v361, 4294901760
        %2167 = vmatpush1.msra.mxu0 %v2166
        %2168 = vmatprep.subr.mxu0 0.0
        %v2169 = vand.u32 %v360, 4294901760
        %2170 = vmatpush1.msra.mxu0 %v2169
        %2171 = vmatprep.subr.mxu0 0.0
        %v2172 = vand.u32 %v359, 4294901760
        %2173 = vmatpush1.msra.mxu0 %v2172
        %2174 = vmatprep.subr.mxu0 0.0
        %v2175 = vand.u32 %v358, 4294901760
        %2176 = vmatpush1.msra.mxu0 %v2175
        %2177 = vmatprep.subr.mxu0 0.0
        %v2178 = vand.u32 %v357, 4294901760
        %2179 = vmatpush1.msra.mxu0 %v2178
        %2180 = vmatprep.subr.mxu0 0.0
        %v2181 = vand.u32 %v356, 4294901760
        %2182 = vmatpush1.msra.mxu0 %v2181
        %2183 = vmatprep.subr.mxu0 0.0
        %v2184 = vand.u32 %v355, 4294901760
        %2185 = vmatpush1.msra.mxu0 %v2184
        %2186 = vmatprep.subr.mxu0 0.0
        %v2187 = vand.u32 %v354, 4294901760
        %2188 = vmatpush1.msra.mxu0 %v2187
        %2189 = vmatprep.subr.mxu0 0.0
        %v2190 = vand.u32 %v353, 4294901760
        %2191 = vmatpush1.msra.mxu0 %v2190
        %2192 = vmatprep.subr.mxu0 0.0
        %v2193 = vand.u32 %v352, 4294901760
        %2194 = vmatpush1.msra.mxu0 %v2193
        %2195 = vmatprep.subr.mxu0 0.0
        %v2196 = vand.u32 %v351, 4294901760
        %2197 = vmatpush1.msra.mxu0 %v2196
        %2198 = vmatprep.subr.mxu0 0.0
        %v2199 = vand.u32 %v350, 4294901760
        %2200 = vmatpush1.msra.mxu0 %v2199
        %2201 = vmatprep.subr.mxu0 0.0
        %v2202 = vand.u32 %v349, 4294901760
        %2203 = vmatpush1.msra.mxu0 %v2202
        %2204 = vmatprep.subr.mxu0 0.0
        %v2205 = vand.u32 %v348, 4294901760
        %2206 = vmatpush1.msra.mxu0 %v2205
        %2207 = vmatprep.subr.mxu0 0.0
        %2208 = vmatpush2.msra.mxu0 0.0
        %2209 = vmatprep.subr.mxu0 0.0
        %2210 = vmatpush2.msra.mxu0 0.0
        %2211 = vmatprep.subr.mxu0 0.0
        %2212 = vmatpush2.msra.mxu0 0.0
        %2213 = vmatprep.subr.mxu0 0.0
        %2214 = vmatpush2.msra.mxu0 0.0
        %2215 = vmatprep.subr.mxu0 0.0
        %2216 = vmatpush2.msra.mxu0 0.0
        %2217 = vmatprep.subr.mxu0 0.0
        %2218 = vmatpush2.msra.mxu0 0.0
        %2219 = vmatprep.subr.mxu0 0.0
        %2220 = vmatpush2.msra.mxu0 0.0
        %2221 = vmatprep.subr.mxu0 0.0
        %2222 = vmatpush2.msra.mxu0 0.0
        %2223 = vmatprep.subr.mxu0 0.0
        %2224 = vmatpush2.msra.mxu0 0.0
        %2225 = vmatprep.subr.mxu0 0.0
        %2226 = vmatpush2.msra.mxu0 0.0
        %2227 = vmatprep.subr.mxu0 0.0
        %2228 = vmatpush2.msra.mxu0 0.0
        %2229 = vmatprep.subr.mxu0 0.0
        %2230 = vmatpush2.msra.mxu0 0.0
        %2231 = vmatprep.subr.mxu0 0.0
        %2232 = vmatpush2.msra.mxu0 0.0
        %2233 = vmatprep.subr.mxu0 0.0
        %2234 = vmatpush2.msra.mxu0 0.0
        %2235 = vmatprep.subr.mxu0 0.0
        %2236 = vmatpush2.msra.mxu0 0.0
        %2237 = vmatprep.subr.mxu0 0.0
        %2238 = vmatpush2.msra.mxu0 0.0
        %2239 = vmatprep.mubr.f32.mxu0 0.0
        %v2240 = vand.u32 %v1604, 4294901760
        %2241 = vmatmul.mubr.f32.gmra.mxu0 %v2240
        %v2242 = vpop.f32.mrf.mxu0
        %v2243 = vadd.f32 %v2156, %v2242
        %v2244 = vpop.f32.mrf.mxu0
        %2245 = vdwg.mxu0
        %v2246 = vmul.f32 %v2243, %v1005
        %v2247 = vadd.f32 %v2246, 1e-06
        %v2248 = vrsqrt.pop %v2247
        %v2250 = vsel %vm1011, %v2248, 0
        %2252 = vmatprep.subr.mxu0 0.0
        %2253 = vmatpush1.msra.mxu0 0.0
        %2254 = vmatprep.subr.mxu0 0.0
        %2255 = vmatpush1.msra.mxu0 0.0
        %2256 = vmatprep.subr.mxu0 0.0
        %2257 = vmatpush1.msra.mxu0 0.0
        %2258 = vmatprep.subr.mxu0 0.0
        %2259 = vmatpush1.msra.mxu0 0.0
        %2260 = vmatprep.subr.mxu0 0.0
        %2261 = vmatpush1.msra.mxu0 0.0
        %2262 = vmatprep.subr.mxu0 0.0
        %2263 = vmatpush1.msra.mxu0 0.0
        %2264 = vmatprep.subr.mxu0 0.0
        %2265 = vmatpush1.msra.mxu0 0.0
        %2266 = vmatprep.subr.mxu0 0.0
        %2267 = vmatpush1.msra.mxu0 0.0
        %2268 = vmatprep.subr.mxu0 0.0
        %2269 = vmatpush1.msra.mxu0 0.0
        %2270 = vmatprep.subr.mxu0 0.0
        %2271 = vmatpush1.msra.mxu0 0.0
        %2272 = vmatprep.subr.mxu0 0.0
        %2273 = vmatpush1.msra.mxu0 0.0
        %2274 = vmatprep.subr.mxu0 0.0
        %2275 = vmatpush1.msra.mxu0 0.0
        %2276 = vmatprep.subr.mxu0 0.0
        %v2277 = vand.u32 %v1010, 4294901760
        %2278 = vmatpush1.msra.mxu0 %v2277
        %2279 = vmatprep.subr.mxu0 0.0
        %v2280 = vand.u32 %v1009, 4294901760
        %2281 = vmatpush1.msra.mxu0 %v2280
        %2282 = vmatprep.subr.mxu0 0.0
        %v2283 = vand.u32 %v1008, 4294901760
        %2284 = vmatpush1.msra.mxu0 %v2283
        %2285 = vmatprep.subr.mxu0 0.0
        %v2286 = vand.u32 %v1007, 4294901760
        %2287 = vmatpush1.msra.mxu0 %v2286
        %2288 = vmatprep.subr.mxu0 0.0
        %2289 = vmatpush2.msra.mxu0 0.0
        %2290 = vmatprep.subr.mxu0 0.0
        %2291 = vmatpush2.msra.mxu0 0.0
        %2292 = vmatprep.subr.mxu0 0.0
        %2293 = vmatpush2.msra.mxu0 0.0
        %2294 = vmatprep.subr.mxu0 0.0
        %2295 = vmatpush2.msra.mxu0 0.0
        %2296 = vmatprep.subr.mxu0 0.0
        %2297 = vmatpush2.msra.mxu0 0.0
        %2298 = vmatprep.subr.mxu0 0.0
        %2299 = vmatpush2.msra.mxu0 0.0
        %2300 = vmatprep.subr.mxu0 0.0
        %2301 = vmatpush2.msra.mxu0 0.0
        %2302 = vmatprep.subr.mxu0 0.0
        %2303 = vmatpush2.msra.mxu0 0.0
        %2304 = vmatprep.subr.mxu0 0.0
        %2305 = vmatpush2.msra.mxu0 0.0
        %2306 = vmatprep.subr.mxu0 0.0
        %2307 = vmatpush2.msra.mxu0 0.0
        %2308 = vmatprep.subr.mxu0 0.0
        %2309 = vmatpush2.msra.mxu0 0.0
        %2310 = vmatprep.subr.mxu0 0.0
        %2311 = vmatpush2.msra.mxu0 0.0
        %2312 = vmatprep.subr.mxu0 0.0
        %2313 = vmatpush2.msra.mxu0 0.0
        %2314 = vmatprep.subr.mxu0 0.0
        %2315 = vmatpush2.msra.mxu0 0.0
        %2316 = vmatprep.subr.mxu0 0.0
        %2317 = vmatpush2.msra.mxu0 0.0
        %2318 = vmatprep.subr.mxu0 0.0
        %2319 = vmatpush2.msra.mxu0 0.0
        %2320 = vmatprep.mubr.f32.mxu0 0.0
        %v2321 = vand.u32 %v2250, 4294901760
        %v2322 = vsub.f32 %v2250, %v2321
        %v2323 = vand.u32 %v2322, 4294901760
        %v2324 = vsub.f32 %v2322, %v2323
        %v2325 = vand.u32 %v2324, 4294901760
        %2326 = vmatmul.mubr.f32.gmra.mxu0 %v2325
        %v2327 = vpop.f32.mrf.mxu0
        %v2328 = vadd.f32 0.0, %v2327
        %v2329 = vpop.f32.mrf.mxu0
        %2330 = vdwg.mxu0
        %2331 = vmatprep.subr.mxu0 0.0
        %2332 = vmatpush1.msra.mxu0 0.0
        %2333 = vmatprep.subr.mxu0 0.0
        %2334 = vmatpush1.msra.mxu0 0.0
        %2335 = vmatprep.subr.mxu0 0.0
        %2336 = vmatpush1.msra.mxu0 0.0
        %2337 = vmatprep.subr.mxu0 0.0
        %2338 = vmatpush1.msra.mxu0 0.0
        %2339 = vmatprep.subr.mxu0 0.0
        %2340 = vmatpush1.msra.mxu0 0.0
        %2341 = vmatprep.subr.mxu0 0.0
        %2342 = vmatpush1.msra.mxu0 0.0
        %2343 = vmatprep.subr.mxu0 0.0
        %2344 = vmatpush1.msra.mxu0 0.0
        %2345 = vmatprep.subr.mxu0 0.0
        %2346 = vmatpush1.msra.mxu0 0.0
        %2347 = vmatprep.subr.mxu0 0.0
        %2348 = vmatpush1.msra.mxu0 0.0
        %2349 = vmatprep.subr.mxu0 0.0
        %2350 = vmatpush1.msra.mxu0 0.0
        %2351 = vmatprep.subr.mxu0 0.0
        %2352 = vmatpush1.msra.mxu0 0.0
        %2353 = vmatprep.subr.mxu0 0.0
        %2354 = vmatpush1.msra.mxu0 0.0
        %2355 = vmatprep.subr.mxu0 0.0
        %v2356 = vand.u32 %v1010, 4294901760
        %v2357 = vsub.f32 %v1010, %v2356
        %v2358 = vand.u32 %v2357, 4294901760
        %v2359 = vsub.f32 %v2357, %v2358
        %v2360 = vand.u32 %v2359, 4294901760
        %2361 = vmatpush1.msra.mxu0 %v2360
        %2362 = vmatprep.subr.mxu0 0.0
        %v2363 = vand.u32 %v1009, 4294901760
        %v2364 = vsub.f32 %v1009, %v2363
        %v2365 = vand.u32 %v2364, 4294901760
        %v2366 = vsub.f32 %v2364, %v2365
        %v2367 = vand.u32 %v2366, 4294901760
        %2368 = vmatpush1.msra.mxu0 %v2367
        %2369 = vmatprep.subr.mxu0 0.0
        %v2370 = vand.u32 %v1008, 4294901760
        %v2371 = vsub.f32 %v1008, %v2370
        %v2372 = vand.u32 %v2371, 4294901760
        %v2373 = vsub.f32 %v2371, %v2372
        %v2374 = vand.u32 %v2373, 4294901760
        %2375 = vmatpush1.msra.mxu0 %v2374
        %2376 = vmatprep.subr.mxu0 0.0
        %v2377 = vand.u32 %v1007, 4294901760
        %v2378 = vsub.f32 %v1007, %v2377
        %v2379 = vand.u32 %v2378, 4294901760
        %v2380 = vsub.f32 %v2378, %v2379
        %v2381 = vand.u32 %v2380, 4294901760
        %2382 = vmatpush1.msra.mxu0 %v2381
        %2383 = vmatprep.subr.mxu0 0.0
        %2384 = vmatpush2.msra.mxu0 0.0
        %2385 = vmatprep.subr.mxu0 0.0
        %2386 = vmatpush2.msra.mxu0 0.0
        %2387 = vmatprep.subr.mxu0 0.0
        %2388 = vmatpush2.msra.mxu0 0.0
        %2389 = vmatprep.subr.mxu0 0.0
        %2390 = vmatpush2.msra.mxu0 0.0
        %2391 = vmatprep.subr.mxu0 0.0
        %2392 = vmatpush2.msra.mxu0 0.0
        %2393 = vmatprep.subr.mxu0 0.0
        %2394 = vmatpush2.msra.mxu0 0.0
        %2395 = vmatprep.subr.mxu0 0.0
        %2396 = vmatpush2.msra.mxu0 0.0
        %2397 = vmatprep.subr.mxu0 0.0
        %2398 = vmatpush2.msra.mxu0 0.0
        %2399 = vmatprep.subr.mxu0 0.0
        %2400 = vmatpush2.msra.mxu0 0.0
        %2401 = vmatprep.subr.mxu0 0.0
        %2402 = vmatpush2.msra.mxu0 0.0
        %2403 = vmatprep.subr.mxu0 0.0
        %2404 = vmatpush2.msra.mxu0 0.0
        %2405 = vmatprep.subr.mxu0 0.0
        %2406 = vmatpush2.msra.mxu0 0.0
        %2407 = vmatprep.subr.mxu0 0.0
        %2408 = vmatpush2.msra.mxu0 0.0
        %2409 = vmatprep.subr.mxu0 0.0
        %2410 = vmatpush2.msra.mxu0 0.0
        %2411 = vmatprep.subr.mxu0 0.0
        %2412 = vmatpush2.msra.mxu0 0.0
        %2413 = vmatprep.subr.mxu0 0.0
        %2414 = vmatpush2.msra.mxu0 0.0
        %2415 = vmatprep.mubr.f32.mxu0 0.0
        %v2416 = vand.u32 %v2250, 4294901760
        %2417 = vmatmul.mubr.f32.gmra.mxu0 %v2416
        %v2418 = vpop.f32.mrf.mxu0
        %v2419 = vadd.f32 %v2328, %v2418
        %v2420 = vpop.f32.mrf.mxu0
        %2421 = vdwg.mxu0
        %2422 = vmatprep.subr.mxu0 0.0
        %2423 = vmatpush1.msra.mxu0 0.0
        %2424 = vmatprep.subr.mxu0 0.0
        %2425 = vmatpush1.msra.mxu0 0.0
        %2426 = vmatprep.subr.mxu0 0.0
        %2427 = vmatpush1.msra.mxu0 0.0
        %2428 = vmatprep.subr.mxu0 0.0
        %2429 = vmatpush1.msra.mxu0 0.0
        %2430 = vmatprep.subr.mxu0 0.0
        %2431 = vmatpush1.msra.mxu0 0.0
        %2432 = vmatprep.subr.mxu0 0.0
        %2433 = vmatpush1.msra.mxu0 0.0
        %2434 = vmatprep.subr.mxu0 0.0
        %2435 = vmatpush1.msra.mxu0 0.0
        %2436 = vmatprep.subr.mxu0 0.0
        %2437 = vmatpush1.msra.mxu0 0.0
        %2438 = vmatprep.subr.mxu0 0.0
        %2439 = vmatpush1.msra.mxu0 0.0
        %2440 = vmatprep.subr.mxu0 0.0
        %2441 = vmatpush1.msra.mxu0 0.0
        %2442 = vmatprep.subr.mxu0 0.0
        %2443 = vmatpush1.msra.mxu0 0.0
        %2444 = vmatprep.subr.mxu0 0.0
        %2445 = vmatpush1.msra.mxu0 0.0
        %2446 = vmatprep.subr.mxu0 0.0
        %v2447 = vand.u32 %v1010, 4294901760
        %v2448 = vsub.f32 %v1010, %v2447
        %2449 = vmatpush1.msra.mxu0 %v2448
        %2450 = vmatprep.subr.mxu0 0.0
        %v2451 = vand.u32 %v1009, 4294901760
        %v2452 = vsub.f32 %v1009, %v2451
        %2453 = vmatpush1.msra.mxu0 %v2452
        %2454 = vmatprep.subr.mxu0 0.0
        %v2455 = vand.u32 %v1008, 4294901760
        %v2456 = vsub.f32 %v1008, %v2455
        %2457 = vmatpush1.msra.mxu0 %v2456
        %2458 = vmatprep.subr.mxu0 0.0
        %v2459 = vand.u32 %v1007, 4294901760
        %v2460 = vsub.f32 %v1007, %v2459
        %2461 = vmatpush1.msra.mxu0 %v2460
        %2462 = vmatprep.subr.mxu0 0.0
        %2463 = vmatpush2.msra.mxu0 0.0
        %2464 = vmatprep.subr.mxu0 0.0
        %2465 = vmatpush2.msra.mxu0 0.0
        %2466 = vmatprep.subr.mxu0 0.0
        %2467 = vmatpush2.msra.mxu0 0.0
        %2468 = vmatprep.subr.mxu0 0.0
        %2469 = vmatpush2.msra.mxu0 0.0
        %2470 = vmatprep.subr.mxu0 0.0
        %2471 = vmatpush2.msra.mxu0 0.0
        %2472 = vmatprep.subr.mxu0 0.0
        %2473 = vmatpush2.msra.mxu0 0.0
        %2474 = vmatprep.subr.mxu0 0.0
        %2475 = vmatpush2.msra.mxu0 0.0
        %2476 = vmatprep.subr.mxu0 0.0
        %2477 = vmatpush2.msra.mxu0 0.0
        %2478 = vmatprep.subr.mxu0 0.0
        %2479 = vmatpush2.msra.mxu0 0.0
        %2480 = vmatprep.subr.mxu0 0.0
        %2481 = vmatpush2.msra.mxu0 0.0
        %2482 = vmatprep.subr.mxu0 0.0
        %2483 = vmatpush2.msra.mxu0 0.0
        %2484 = vmatprep.subr.mxu0 0.0
        %2485 = vmatpush2.msra.mxu0 0.0
        %2486 = vmatprep.subr.mxu0 0.0
        %2487 = vmatpush2.msra.mxu0 0.0
        %2488 = vmatprep.subr.mxu0 0.0
        %2489 = vmatpush2.msra.mxu0 0.0
        %2490 = vmatprep.subr.mxu0 0.0
        %2491 = vmatpush2.msra.mxu0 0.0
        %2492 = vmatprep.subr.mxu0 0.0
        %2493 = vmatpush2.msra.mxu0 0.0
        %2494 = vmatprep.mubr.f32.mxu0 0.0
        %v2495 = vand.u32 %v2250, 4294901760
        %v2496 = vsub.f32 %v2250, %v2495
        %2497 = vmatmul.mubr.f32.gmra.mxu0 %v2496
        %v2498 = vpop.f32.mrf.mxu0
        %v2499 = vadd.f32 %v2419, %v2498
        %v2500 = vpop.f32.mrf.mxu0
        %2501 = vdwg.mxu0
        %2502 = vmatprep.subr.mxu0 0.0
        %2503 = vmatpush1.msra.mxu0 0.0
        %2504 = vmatprep.subr.mxu0 0.0
        %2505 = vmatpush1.msra.mxu0 0.0
        %2506 = vmatprep.subr.mxu0 0.0
        %2507 = vmatpush1.msra.mxu0 0.0
        %2508 = vmatprep.subr.mxu0 0.0
        %2509 = vmatpush1.msra.mxu0 0.0
        %2510 = vmatprep.subr.mxu0 0.0
        %2511 = vmatpush1.msra.mxu0 0.0
        %2512 = vmatprep.subr.mxu0 0.0
        %2513 = vmatpush1.msra.mxu0 0.0
        %2514 = vmatprep.subr.mxu0 0.0
        %2515 = vmatpush1.msra.mxu0 0.0
        %2516 = vmatprep.subr.mxu0 0.0
        %2517 = vmatpush1.msra.mxu0 0.0
        %2518 = vmatprep.subr.mxu0 0.0
        %2519 = vmatpush1.msra.mxu0 0.0
        %2520 = vmatprep.subr.mxu0 0.0
        %2521 = vmatpush1.msra.mxu0 0.0
        %2522 = vmatprep.subr.mxu0 0.0
        %2523 = vmatpush1.msra.mxu0 0.0
        %2524 = vmatprep.subr.mxu0 0.0
        %2525 = vmatpush1.msra.mxu0 0.0
        %2526 = vmatprep.subr.mxu0 0.0
        %v2527 = vand.u32 %v1010, 4294901760
        %2528 = vmatpush1.msra.mxu0 %v2527
        %2529 = vmatprep.subr.mxu0 0.0
        %v2530 = vand.u32 %v1009, 4294901760
        %2531 = vmatpush1.msra.mxu0 %v2530
        %2532 = vmatprep.subr.mxu0 0.0
        %v2533 = vand.u32 %v1008, 4294901760
        %2534 = vmatpush1.msra.mxu0 %v2533
        %2535 = vmatprep.subr.mxu0 0.0
        %v2536 = vand.u32 %v1007, 4294901760
        %2537 = vmatpush1.msra.mxu0 %v2536
        %2538 = vmatprep.subr.mxu0 0.0
        %2539 = vmatpush2.msra.mxu0 0.0
        %2540 = vmatprep.subr.mxu0 0.0
        %2541 = vmatpush2.msra.mxu0 0.0
        %2542 = vmatprep.subr.mxu0 0.0
        %2543 = vmatpush2.msra.mxu0 0.0
        %2544 = vmatprep.subr.mxu0 0.0
        %2545 = vmatpush2.msra.mxu0 0.0
        %2546 = vmatprep.subr.mxu0 0.0
        %2547 = vmatpush2.msra.mxu0 0.0
        %2548 = vmatprep.subr.mxu0 0.0
        %2549 = vmatpush2.msra.mxu0 0.0
        %2550 = vmatprep.subr.mxu0 0.0
        %2551 = vmatpush2.msra.mxu0 0.0
        %2552 = vmatprep.subr.mxu0 0.0
        %2553 = vmatpush2.msra.mxu0 0.0
        %2554 = vmatprep.subr.mxu0 0.0
        %2555 = vmatpush2.msra.mxu0 0.0
        %2556 = vmatprep.subr.mxu0 0.0
        %2557 = vmatpush2.msra.mxu0 0.0
        %2558 = vmatprep.subr.mxu0 0.0
        %2559 = vmatpush2.msra.mxu0 0.0
        %2560 = vmatprep.subr.mxu0 0.0
        %2561 = vmatpush2.msra.mxu0 0.0
        %2562 = vmatprep.subr.mxu0 0.0
        %2563 = vmatpush2.msra.mxu0 0.0
        %2564 = vmatprep.subr.mxu0 0.0
        %2565 = vmatpush2.msra.mxu0 0.0
        %2566 = vmatprep.subr.mxu0 0.0
        %2567 = vmatpush2.msra.mxu0 0.0
        %2568 = vmatprep.subr.mxu0 0.0
        %2569 = vmatpush2.msra.mxu0 0.0
        %2570 = vmatprep.mubr.f32.mxu0 0.0
        %v2571 = vand.u32 %v2250, 4294901760
        %v2572 = vsub.f32 %v2250, %v2571
        %v2573 = vand.u32 %v2572, 4294901760
        %2574 = vmatmul.mubr.f32.gmra.mxu0 %v2573
        %v2575 = vpop.f32.mrf.mxu0
        %v2576 = vadd.f32 %v2499, %v2575
        %v2577 = vpop.f32.mrf.mxu0
        %2578 = vdwg.mxu0
        %2579 = vmatprep.subr.mxu0 0.0
        %2580 = vmatpush1.msra.mxu0 0.0
        %2581 = vmatprep.subr.mxu0 0.0
        %2582 = vmatpush1.msra.mxu0 0.0
        %2583 = vmatprep.subr.mxu0 0.0
        %2584 = vmatpush1.msra.mxu0 0.0
        %2585 = vmatprep.subr.mxu0 0.0
        %2586 = vmatpush1.msra.mxu0 0.0
        %2587 = vmatprep.subr.mxu0 0.0
        %2588 = vmatpush1.msra.mxu0 0.0
        %2589 = vmatprep.subr.mxu0 0.0
        %2590 = vmatpush1.msra.mxu0 0.0
        %2591 = vmatprep.subr.mxu0 0.0
        %2592 = vmatpush1.msra.mxu0 0.0
        %2593 = vmatprep.subr.mxu0 0.0
        %2594 = vmatpush1.msra.mxu0 0.0
        %2595 = vmatprep.subr.mxu0 0.0
        %2596 = vmatpush1.msra.mxu0 0.0
        %2597 = vmatprep.subr.mxu0 0.0
        %2598 = vmatpush1.msra.mxu0 0.0
        %2599 = vmatprep.subr.mxu0 0.0
        %2600 = vmatpush1.msra.mxu0 0.0
        %2601 = vmatprep.subr.mxu0 0.0
        %2602 = vmatpush1.msra.mxu0 0.0
        %2603 = vmatprep.subr.mxu0 0.0
        %v2604 = vand.u32 %v1010, 4294901760
        %v2605 = vsub.f32 %v1010, %v2604
        %v2606 = vand.u32 %v2605, 4294901760
        %2607 = vmatpush1.msra.mxu0 %v2606
        %2608 = vmatprep.subr.mxu0 0.0
        %v2609 = vand.u32 %v1009, 4294901760
        %v2610 = vsub.f32 %v1009, %v2609
        %v2611 = vand.u32 %v2610, 4294901760
        %2612 = vmatpush1.msra.mxu0 %v2611
        %2613 = vmatprep.subr.mxu0 0.0
        %v2614 = vand.u32 %v1008, 4294901760
        %v2615 = vsub.f32 %v1008, %v2614
        %v2616 = vand.u32 %v2615, 4294901760
        %2617 = vmatpush1.msra.mxu0 %v2616
        %2618 = vmatprep.subr.mxu0 0.0
        %v2619 = vand.u32 %v1007, 4294901760
        %v2620 = vsub.f32 %v1007, %v2619
        %v2621 = vand.u32 %v2620, 4294901760
        %2622 = vmatpush1.msra.mxu0 %v2621
        %2623 = vmatprep.subr.mxu0 0.0
        %2624 = vmatpush2.msra.mxu0 0.0
        %2625 = vmatprep.subr.mxu0 0.0
        %2626 = vmatpush2.msra.mxu0 0.0
        %2627 = vmatprep.subr.mxu0 0.0
        %2628 = vmatpush2.msra.mxu0 0.0
        %2629 = vmatprep.subr.mxu0 0.0
        %2630 = vmatpush2.msra.mxu0 0.0
        %2631 = vmatprep.subr.mxu0 0.0
        %2632 = vmatpush2.msra.mxu0 0.0
        %2633 = vmatprep.subr.mxu0 0.0
        %2634 = vmatpush2.msra.mxu0 0.0
        %2635 = vmatprep.subr.mxu0 0.0
        %2636 = vmatpush2.msra.mxu0 0.0
        %2637 = vmatprep.subr.mxu0 0.0
        %2638 = vmatpush2.msra.mxu0 0.0
        %2639 = vmatprep.subr.mxu0 0.0
        %2640 = vmatpush2.msra.mxu0 0.0
        %2641 = vmatprep.subr.mxu0 0.0
        %2642 = vmatpush2.msra.mxu0 0.0
        %2643 = vmatprep.subr.mxu0 0.0
        %2644 = vmatpush2.msra.mxu0 0.0
        %2645 = vmatprep.subr.mxu0 0.0
        %2646 = vmatpush2.msra.mxu0 0.0
        %2647 = vmatprep.subr.mxu0 0.0
        %2648 = vmatpush2.msra.mxu0 0.0
        %2649 = vmatprep.subr.mxu0 0.0
        %2650 = vmatpush2.msra.mxu0 0.0
        %2651 = vmatprep.subr.mxu0 0.0
        %2652 = vmatpush2.msra.mxu0 0.0
        %2653 = vmatprep.subr.mxu0 0.0
        %2654 = vmatpush2.msra.mxu0 0.0
        %2655 = vmatprep.mubr.f32.mxu0 0.0
        %v2656 = vand.u32 %v2250, 4294901760
        %2657 = vmatmul.mubr.f32.gmra.mxu0 %v2656
        %v2658 = vpop.f32.mrf.mxu0
        %v2659 = vadd.f32 %v2576, %v2658
        %v2660 = vpop.f32.mrf.mxu0
        %2661 = vdwg.mxu0
        %2662 = vmatprep.subr.mxu0 0.0
        %2663 = vmatpush1.msra.mxu0 0.0
        %2664 = vmatprep.subr.mxu0 0.0
        %2665 = vmatpush1.msra.mxu0 0.0
        %2666 = vmatprep.subr.mxu0 0.0
        %2667 = vmatpush1.msra.mxu0 0.0
        %2668 = vmatprep.subr.mxu0 0.0
        %2669 = vmatpush1.msra.mxu0 0.0
        %2670 = vmatprep.subr.mxu0 0.0
        %2671 = vmatpush1.msra.mxu0 0.0
        %2672 = vmatprep.subr.mxu0 0.0
        %2673 = vmatpush1.msra.mxu0 0.0
        %2674 = vmatprep.subr.mxu0 0.0
        %2675 = vmatpush1.msra.mxu0 0.0
        %2676 = vmatprep.subr.mxu0 0.0
        %2677 = vmatpush1.msra.mxu0 0.0
        %2678 = vmatprep.subr.mxu0 0.0
        %2679 = vmatpush1.msra.mxu0 0.0
        %2680 = vmatprep.subr.mxu0 0.0
        %2681 = vmatpush1.msra.mxu0 0.0
        %2682 = vmatprep.subr.mxu0 0.0
        %2683 = vmatpush1.msra.mxu0 0.0
        %2684 = vmatprep.subr.mxu0 0.0
        %2685 = vmatpush1.msra.mxu0 0.0
        %2686 = vmatprep.subr.mxu0 0.0
        %v2687 = vand.u32 %v1010, 4294901760
        %2688 = vmatpush1.msra.mxu0 %v2687
        %2689 = vmatprep.subr.mxu0 0.0
        %v2690 = vand.u32 %v1009, 4294901760
        %2691 = vmatpush1.msra.mxu0 %v2690
        %2692 = vmatprep.subr.mxu0 0.0
        %v2693 = vand.u32 %v1008, 4294901760
        %2694 = vmatpush1.msra.mxu0 %v2693
        %2695 = vmatprep.subr.mxu0 0.0
        %v2696 = vand.u32 %v1007, 4294901760
        %2697 = vmatpush1.msra.mxu0 %v2696
        %2698 = vmatprep.subr.mxu0 0.0
        %2699 = vmatpush2.msra.mxu0 0.0
        %2700 = vmatprep.subr.mxu0 0.0
        %2701 = vmatpush2.msra.mxu0 0.0
        %2702 = vmatprep.subr.mxu0 0.0
        %2703 = vmatpush2.msra.mxu0 0.0
        %2704 = vmatprep.subr.mxu0 0.0
        %2705 = vmatpush2.msra.mxu0 0.0
        %2706 = vmatprep.subr.mxu0 0.0
        %2707 = vmatpush2.msra.mxu0 0.0
        %2708 = vmatprep.subr.mxu0 0.0
        %2709 = vmatpush2.msra.mxu0 0.0
        %2710 = vmatprep.subr.mxu0 0.0
        %2711 = vmatpush2.msra.mxu0 0.0
        %2712 = vmatprep.subr.mxu0 0.0
        %2713 = vmatpush2.msra.mxu0 0.0
        %2714 = vmatprep.subr.mxu0 0.0
        %2715 = vmatpush2.msra.mxu0 0.0
        %2716 = vmatprep.subr.mxu0 0.0
        %2717 = vmatpush2.msra.mxu0 0.0
        %2718 = vmatprep.subr.mxu0 0.0
        %2719 = vmatpush2.msra.mxu0 0.0
        %2720 = vmatprep.subr.mxu0 0.0
        %2721 = vmatpush2.msra.mxu0 0.0
        %2722 = vmatprep.subr.mxu0 0.0
        %2723 = vmatpush2.msra.mxu0 0.0
        %2724 = vmatprep.subr.mxu0 0.0
        %2725 = vmatpush2.msra.mxu0 0.0
        %2726 = vmatprep.subr.mxu0 0.0
        %2727 = vmatpush2.msra.mxu0 0.0
        %2728 = vmatprep.subr.mxu0 0.0
        %2729 = vmatpush2.msra.mxu0 0.0
        %2730 = vmatprep.mubr.f32.mxu0 0.0
        %v2731 = vand.u32 %v2250, 4294901760
        %2732 = vmatmul.mubr.f32.gmra.mxu0 %v2731
        %v2733 = vpop.f32.mrf.mxu0
        %v2734 = vadd.f32 %v2659, %v2733
        %v2735 = vpop.f32.mrf.mxu0
        %2736 = vdwg.mxu0
        %v2737 = vld [vmem:[%s1] sm:$0x1]
        %v2738 = vmul.f32 %v2734, %v2737
        %v2739 = vld [vmem:[%s2] sm:$0x1]
        %v2740 = vmul.f32 %v1497, %v2738
        %v2741 = vsub.f32 %v2739, %v2740
        %2742 = vst [vmem:[%s272] sm:$0x1] %v2738
        %2743 = vst [vmem:[%s278] sm:$0x1] %v2741
        %s2744 = sand.u32 %s145, 1
        %s2745 = scalar_lea.sflag [#allocation4], %s2744
        %s2746 = sand.u32 %s145, 1
        %s2747 = scalar_lea.vmem [#allocation5], %s2746
        %s2748 = sand.u32 %s171, 1
        %s2749 = scalar_lea.sflag [#allocation7], %s2748
        %s2750 = sand.u32 %s171, 1
        %s2751 = scalar_lea.vmem [#allocation6], %s2750
        // Predicated region
        $region45: #{tpu_custom_call.1} parent=39 // pred_check
          %p2752 = pneg %p155
        $region46: #{tpu_custom_call.1} parent=39 // pred_check_branch
          %2754 = sbr.rel (%p2752) target = $region48
        $region47: #{tpu_custom_call.1} parent=39 // pred_region
          %s2756 = ssub.s32 16, 16
          %2757 = vsyncadd %s2745, %s2756
          %s2758 = smul.addr %s27, 16
          %s2759 = scalar_lea.hbm %s5, %s2758
          %s2761 = sshll.u32 %s2747, 4
          %s2762 = int_to_ptr.vmem [resolvable:$true] %s2761
          %2764 = dma.vmem_to_hbm [thread:$0]  %s2762, 16, %s2759, %s2745
        $region48: #{tpu_custom_call.1} parent=39 // pred_fallthru
          _
        // Predicated region
        $region49: #{tpu_custom_call.1} parent=39 // pred_check
          %p2765 = pneg %p181
        $region50: #{tpu_custom_call.1} parent=39 // pred_check_branch
          %2767 = sbr.rel (%p2765) target = $region52
        $region51: #{tpu_custom_call.1} parent=39 // pred_region
          %s2769 = ssub.s32 16, 16
          %2770 = vsyncadd %s2749, %s2769
          %s2771 = smul.addr %s27, 16
          %s2772 = scalar_lea.hbm %s6, %s2771
          %s2774 = sshll.u32 %s2751, 4
          %s2775 = int_to_ptr.vmem [resolvable:$true] %s2774
          %2777 = dma.vmem_to_hbm [thread:$0]  %s2775, 16, %s2772, %s2749
        $region52: #{tpu_custom_call.1} parent=39 // pred_fallthru
          _
      $region40: #{tpu_custom_call.1} parent=5 // pred_fallthru
        _
      %p2778 = scmp.le.s32.totalorder 2, %s22
      // Predicated region
      $region53: #{tpu_custom_call.1} parent=5 // pred_check
        %p2779 = pneg %p2778
      $region54: #{tpu_custom_call.1} parent=5 // pred_check_branch
        %2781 = sbr.rel (%p2779) target = $region56
      $region55: #{tpu_custom_call.1} parent=5 // pred_region
        %s2782 = ssub.s32 %s22, 2
        // Predicated region
        $region57: #{tpu_custom_call.1} parent=55 // pred_check
          %p2783 = pneg %p161
        $region58: #{tpu_custom_call.1} parent=55 // pred_check_branch
          %2785 = sbr.rel (%p2783) target = $region60
        $region59: #{tpu_custom_call.1} parent=55 // pred_region
          %s2786 = sand.u32 %s146, 1
          %s2787 = scalar_lea.sflag [#allocation4], %s2786
          %s2788 = sand.u32 %s146, 1
          %s2789 = scalar_lea.vmem [#allocation5], %s2788
          %2790 = dma.done %s2787, 16
        $region60: #{tpu_custom_call.1} parent=55 // pred_fallthru
          _
        // Predicated region
        $region61: #{tpu_custom_call.1} parent=55 // pred_check
          %p2791 = pneg %p187
        $region62: #{tpu_custom_call.1} parent=55 // pred_check_branch
          %2793 = sbr.rel (%p2791) target = $region64
        $region63: #{tpu_custom_call.1} parent=55 // pred_region
          %s2794 = sand.u32 %s172, 1
          %s2795 = scalar_lea.sflag [#allocation7], %s2794
          %s2796 = sand.u32 %s172, 1
          %s2797 = scalar_lea.vmem [#allocation6], %s2796
          %2798 = dma.done %s2795, 16
        $region64: #{tpu_custom_call.1} parent=55 // pred_fallthru
          _
      $region56: #{tpu_custom_call.1} parent=5 // pred_fallthru
        _
    $region6: #{tpu_custom_call.1} parent=1 // loop_footer
      %s26 = sadd.s32 1, %s22
    $region7: #{tpu_custom_call.1} parent=1 // loop_footer_branch
      %21 = sbr.rel target = $region3
    $region8: #{tpu_custom_call.1} parent=1 // loop_exit
      _
    %2799 = vsyncpa [#allocation3], 1
    %s2800 = scalar_lea.sflag [#allocation3], 1
    %2801 = vsyncpa %s2800, 1
    %2802 = vsyncpa [#allocation4], 1
    %s2803 = scalar_lea.sflag [#allocation4], 1
    %2804 = vsyncpa %s2803, 1
    %2805 = vsyncpa [#allocation7], 1
    %s2806 = scalar_lea.sflag [#allocation7], 1
    %2807 = vsyncpa %s2806, 1

</llo_original>
